<compile_context>
chip_gen: v7x
topology: tpu7x:2x2x1
jax: 0.10.0
libtpu: 0.0.40
codegen_flags: <defaults>
</compile_context>

<pallas_src>
import functools

import jax
import jax.numpy as jnp
from jax.experimental import pallas as pl
from jax.experimental.pallas import tpu as pltpu


def _round_up(n, m):
    return ((n + m - 1) // m) * m


def _mlp_kernel(x_ref, w1_ref, b1_ref, w2_ref, b2_ref, o_ref):
    # x: (TILE_B, D)   w1: (D, H)   b1: (1, H)   w2: (1, H)   b2: (1, 1) in SMEM
    # o: (1, TILE_B)   -- batch laid out along the 128-wide lane axis (lane-dense store)
    x = x_ref[...]

    # Layer 1 + ReLU (MXU matmul, f32 accumulate, full-precision passes).
    h = jnp.dot(
        x,
        w1_ref[...],
        preferred_element_type=jnp.float32,
        precision=jax.lax.Precision.HIGHEST,
    )
    h = jnp.maximum(h + b1_ref[...], 0.0)

    # Layer 2: contract H of (1, H) against H of (TILE_B, H) -> (1, TILE_B).
    # Same dot_general pattern as q @ k^T in attention; the result comes out
    # lane-dense, so no transpose/relayout is needed before the store.
    y = jax.lax.dot_general(
        w2_ref[...],
        h,
        dimension_numbers=(((1,), (1,)), ((), ())),
        preferred_element_type=jnp.float32,
        precision=jax.lax.Precision.HIGHEST,
    )
    y = y + b2_ref[0, 0]  # scalar bias from SMEM

    o_ref[...] = jax.nn.sigmoid(y).astype(o_ref.dtype)


@functools.partial(jax.jit, static_argnames=("tile_b",))
def medium_model_forward(x, w1, b1, w2, b2, *, tile_b=8192):
    B, D = x.shape
    H = w1.shape[1]

    # Batch tile: multiple of 128 so the lane-dense output block is unmasked,
    # clamped so tiny batches still run as a single grid step.
    tb = min(tile_b, _round_up(B, 128))
    b_pad = _round_up(B, tb)
    if b_pad != B:
        x = jnp.pad(x, ((0, b_pad - B), (0, 0)))
    grid = (b_pad // tb,)

    out = pl.pallas_call(
        _mlp_kernel,
        out_shape=jax.ShapeDtypeStruct((1, b_pad), jnp.float32),
        grid=grid,
        in_specs=[
            # x streamed in (TILE_B, D) row blocks (auto double-buffered).
            pl.BlockSpec((tb, D), lambda i: (i, 0)),
            # Weights/biases: whole-array blocks with a constant index map -> stay VMEM-resident.
            pl.BlockSpec((D, H), lambda i: (0, 0)),
            pl.BlockSpec((1, H), lambda i: (0, 0)),
            pl.BlockSpec((1, H), lambda i: (0, 0)),
            # Scalar second-layer bias in SMEM.
            pl.BlockSpec(memory_space=pltpu.MemorySpace.SMEM),
        ],
        out_specs=pl.BlockSpec((1, tb), lambda i: (0, i)),
        compiler_params=pltpu.CompilerParams(
            dimension_semantics=("parallel",),  # megacore / 2-TC sharding over batch tiles
            vmem_limit_bytes=32 * 1024 * 1024,  # covers x double-buffer + h temps on v5e/v6e/v7x
        ),
    )(x, w1, b1, w2, b2)

    # Lane-dense (1, b_pad) slab -> (B, 1), dropping padded rows.
    return out[0, :B].reshape(B, 1)


def init_params(key, input_dim, hidden=50):
    # Deterministic init mimicking nn.Linear's uniform(-1/sqrt(fan_in), 1/sqrt(fan_in)).
    k1, k2, k3, k4 = jax.random.split(key, 4)
    bound1 = 1.0 / jnp.sqrt(jnp.float32(input_dim))
    bound2 = 1.0 / jnp.sqrt(jnp.float32(hidden))
    w1 = jax.random.uniform(k1, (input_dim, hidden), jnp.float32, -bound1, bound1)
    b1 = jax.random.uniform(k2, (1, hidden), jnp.float32, -bound1, bound1)
    w2 = jax.random.uniform(k3, (1, hidden), jnp.float32, -bound2, bound2)  # PyTorch (out,in) layout
    b2 = jax.random.uniform(k4, (1, 1), jnp.float32, -bound2, bound2)
    return w1, b1, w2, b2


if __name__ == "__main__":
    key = jax.random.PRNGKey(0)
    kx, kp, kx2 = jax.random.split(key, 3)

    input_dim, hidden = 32, 50
    w1, b1, w2, b2 = init_params(kp, input_dim, hidden)

    def reference(x):
        h = jnp.maximum(
            jnp.dot(x, w1, precision=jax.lax.Precision.HIGHEST) + b1, 0.0
        )
        y = jnp.dot(h, w2.T, precision=jax.lax.Precision.HIGHEST) + b2
        return jax.nn.sigmoid(y)

    # Small case (single grid step).
    x_small = jax.random.normal(kx, (8, input_dim), jnp.float32)
    out_small = jax.block_until_ready(medium_model_forward(x_small, w1, b1, w2, b2))
    assert out_small.shape == (8, 1)
    assert jnp.allclose(out_small, reference(x_small), atol=1e-5), "mismatch (small batch)"

    # Multi-tile case with batch padding (exercises the batch grid + resident weights).
    x_big = jax.random.normal(kx2, (1000, input_dim), jnp.float32)
    out_big = jax.block_until_ready(
        medium_model_forward(x_big, w1, b1, w2, b2, tile_b=256)
    )
    assert out_big.shape == (1000, 1)
    assert jnp.allclose(out_big, reference(x_big), atol=1e-5), "mismatch (tiled batch)"

    print("KERNEL_OK")
</pallas_src>

<mosaic_0001>
module attributes {stable_mosaic.version = 11 : i64} {
  func.func @_mlp_kernel(%arg0: i32, %arg1: memref<128x32xf32, #tpu.memory_space<vmem>>, %arg2: memref<32x50xf32, #tpu.memory_space<vmem>>, %arg3: memref<1x50xf32, #tpu.memory_space<vmem>>, %arg4: memref<1x50xf32, #tpu.memory_space<vmem>>, %arg5: memref<1x1xf32, #tpu.memory_space<smem>>, %arg6: memref<1x128xf32, #tpu.memory_space<vmem>>) attributes {dimension_semantics = [#tpu.dimension_semantics<parallel>], iteration_bounds = array<i64: 1>, scalar_prefetch = 0 : i64, scratch_operands = 0 : i64, tpu.core_type = #tpu.core_type<tc>, window_params = [{transform_indices = @transform_0, window_bounds = array<i64: 128, 32>}, {pipeline_mode = #tpu.pipeline_mode<synchronous>, transform_indices = @transform_1, window_bounds = array<i64: 32, 50>}, {pipeline_mode = #tpu.pipeline_mode<synchronous>, transform_indices = @transform_2, window_bounds = array<i64: 1, 50>}, {pipeline_mode = #tpu.pipeline_mode<synchronous>, transform_indices = @transform_3, window_bounds = array<i64: 1, 50>}, {transform_indices = @transform_4, window_bounds = array<i64: 1, 1>}, {transform_indices = @transform_5, window_bounds = array<i64: 1, 128>}]} {
    %c0 = arith.constant 0 : index
    %c0_0 = arith.constant 0 : index
    %0 = vector.load %arg1[%c0, %c0_0] : memref<128x32xf32, #tpu.memory_space<vmem>>, vector<128x32xf32>
    %c0_1 = arith.constant 0 : index
    %c0_2 = arith.constant 0 : index
    %1 = vector.load %arg2[%c0_1, %c0_2] : memref<32x50xf32, #tpu.memory_space<vmem>>, vector<32x50xf32>
    %cst = arith.constant dense<0.000000e+00> : vector<128x50xf32>
    %2 = tpu.matmul %0, %1, %cst {dimension_numbers = #tpu.dot_dimension_numbers<[1], [0], [0], [1], [0, 0, 1, 1], [], []>, precision = #tpu.contract_precision<fp32>} : vector<128x32xf32>, vector<32x50xf32>, vector<128x50xf32> -> vector<128x50xf32>
    %c0_3 = arith.constant 0 : index
    %c0_4 = arith.constant 0 : index
    %3 = vector.load %arg3[%c0_3, %c0_4] : memref<1x50xf32, #tpu.memory_space<vmem>>, vector<1x50xf32>
    %4 = vector.broadcast %3 : vector<1x50xf32> to vector<128x50xf32>
    %5 = arith.addf %2, %4 : vector<128x50xf32>
    %cst_5 = arith.constant 0.000000e+00 : f32
    %6 = vector.broadcast %cst_5 : f32 to vector<128x50xf32>
    %7 = arith.maximumf %5, %6 : vector<128x50xf32>
    %c0_6 = arith.constant 0 : index
    %c0_7 = arith.constant 0 : index
    %8 = vector.load %arg4[%c0_6, %c0_7] : memref<1x50xf32, #tpu.memory_space<vmem>>, vector<1x50xf32>
    %cst_8 = arith.constant dense<0.000000e+00> : vector<1x128xf32>
    %9 = tpu.matmul %8, %7, %cst_8 {dimension_numbers = #tpu.dot_dimension_numbers<[1], [1], [0], [0], [0, 0, 1, 0], [], []>, precision = #tpu.contract_precision<fp32>} : vector<1x50xf32>, vector<128x50xf32>, vector<1x128xf32> -> vector<1x128xf32>
    %c0_9 = arith.constant 0 : index
    %c0_10 = arith.constant 0 : index
    %10 = memref.load %arg5[%c0_9, %c0_10] : memref<1x1xf32, #tpu.memory_space<smem>>
    %11 = vector.broadcast %10 : f32 to vector<1x128xf32>
    %12 = arith.addf %9, %11 : vector<1x128xf32>
    %13 = arith.negf %12 : vector<1x128xf32>
    %14 = math.exp %13 : vector<1x128xf32>
    %cst_11 = arith.constant 1.000000e+00 : f32
    %15 = vector.broadcast %cst_11 : f32 to vector<1x128xf32>
    %16 = arith.addf %15, %14 : vector<1x128xf32>
    %17 = arith.divf %15, %16 : vector<1x128xf32>
    %c0_12 = arith.constant 0 : index
    %c0_13 = arith.constant 0 : index
    %18 = vector.load %arg6[%c0_12, %c0_13] : memref<1x128xf32, #tpu.memory_space<vmem>>, vector<1x128xf32>
    tpu.vector_store %arg6[%c0_12, %c0_13], %17 {strides = array<i32>} : memref<1x128xf32, #tpu.memory_space<vmem>>, vector<1x128xf32>,
    return
  }
  func.func @transform_0(%arg0: i32) -> (i32, i32) {
    %c0_i32 = arith.constant 0 : i32
    %c0_i32_0 = arith.constant 0 : i32
    return %arg0, %c0_i32 : i32, i32
  }
  func.func @transform_1(%arg0: i32) -> (i32, i32) {
    %c0_i32 = arith.constant 0 : i32
    %c0_i32_0 = arith.constant 0 : i32
    %c0_i32_1 = arith.constant 0 : i32
    return %c0_i32, %c0_i32_0 : i32, i32
  }
  func.func @transform_2(%arg0: i32) -> (i32, i32) {
    %c0_i32 = arith.constant 0 : i32
    %c0_i32_0 = arith.constant 0 : i32
    %c0_i32_1 = arith.constant 0 : i32
    return %c0_i32, %c0_i32_0 : i32, i32
  }
  func.func @transform_3(%arg0: i32) -> (i32, i32) {
    %c0_i32 = arith.constant 0 : i32
    %c0_i32_0 = arith.constant 0 : i32
    %c0_i32_1 = arith.constant 0 : i32
    return %c0_i32, %c0_i32_0 : i32, i32
  }
  func.func @transform_4(%arg0: i32) -> (i32, i32) {
    %c0_i32 = arith.constant 0 : i32
    %c0_i32_0 = arith.constant 0 : i32
    %c0_i32_1 = arith.constant 0 : i32
    return %c0_i32, %c0_i32_0 : i32, i32
  }
  func.func @transform_5(%arg0: i32) -> (i32, i32) {
    %c0_i32 = arith.constant 0 : i32
    %c0_i32_0 = arith.constant 0 : i32
    return %c0_i32, %arg0 : i32, i32
  }
}

</mosaic_0001>

<llo_original>
// kernel: medium_model_forward.1
$region0: #{medium_model_forward.1}
  #allocation0 [shape = 'u32[]', space=smem, size = 0x4, offset = 0x4, fixed_abs, tag = 'smem constant byte address 0x4 - core index']
  #allocation1 [shape = 'u32[144,128]{1,0:T(1,128)}', space=vmem, size = 0x12000, scoped, tag = 'internal scratch']
  #allocation2 [shape = 'f32[1,1]{1,0:T(1,128)S(6)}', space=smem, size = 0x200, scoped, tag = 'scoped memory for medium_model_forward.1']
  %s0 = inlined_call_operand.vmem [shape: f32[128,32], index: 0, kind: input, shape index: {}]
  %s1 = inlined_call_operand.vmem [shape: f32[32,50], index: 1, kind: input, shape index: {}]
  %s2 = inlined_call_operand.vmem [shape: f32[1,50], index: 2, kind: input, shape index: {}]
  %s3 = inlined_call_operand.vmem [shape: f32[1,50], index: 3, kind: input, shape index: {}]
  %s4 = inlined_call_operand.<no memory space> [shape: f32[1,1], index: 4, kind: input, shape index: {}]
  %s5 = inlined_call_operand.vmem [shape: f32[1,128], index: 5, kind: output, shape index: {}]
  %s6 = sld [smem:[#allocation0]]
  $region30: #{medium_model_forward.1} parent=0
    _
  %s8 = ssub.s32 1, %s6
  %s9 = scalar_select 0, %s8, %s6
  %10 = sst [smem:[#allocation2]] %s4
  // Predicated region
  $region2: #{medium_model_forward.1} parent=0 // pred_check
    _
  $region3: #{medium_model_forward.1} parent=0 // pred_check_branch
    %12 = sbr.rel (0) target = $region5
  $region4: #{medium_model_forward.1} parent=0 // pred_region
    _
  $region5: #{medium_model_forward.1} parent=0 // pred_fallthru
    _
  // Predicated region
  $region6: #{medium_model_forward.1} parent=0 // pred_check
    _
  $region7: #{medium_model_forward.1} parent=0 // pred_check_branch
    %14 = sbr.rel (0) target = $region9
  $region8: #{medium_model_forward.1} parent=0 // pred_region
    _
  $region9: #{medium_model_forward.1} parent=0 // pred_fallthru
    _
  // Predicated region
  $region10: #{medium_model_forward.1} parent=0 // pred_check
    _
  $region11: #{medium_model_forward.1} parent=0 // pred_check_branch
    %16 = sbr.rel (0) target = $region13
  $region12: #{medium_model_forward.1} parent=0 // pred_region
    _
  $region13: #{medium_model_forward.1} parent=0 // pred_fallthru
    _
  // Predicated region
  $region14: #{medium_model_forward.1} parent=0 // pred_check
    _
  $region15: #{medium_model_forward.1} parent=0 // pred_check_branch
    %18 = sbr.rel (0) target = $region17
  $region16: #{medium_model_forward.1} parent=0 // pred_region
    _
  $region17: #{medium_model_forward.1} parent=0 // pred_fallthru
    _
  // Predicated region
  $region18: #{medium_model_forward.1} parent=0 // pred_check
    _
  $region19: #{medium_model_forward.1} parent=0 // pred_check_branch
    %20 = sbr.rel (0) target = $region21
  $region20: #{medium_model_forward.1} parent=0 // pred_region
    _
  $region21: #{medium_model_forward.1} parent=0 // pred_fallthru
    _
  %v21 = vld [vmem:[%s0] sm:$0xff]
  %v22 = vld [vmem:[%s0 + $0x8] sm:$0xff]
  %v23 = vld [vmem:[%s0 + $0x10] sm:$0xff]
  %v24 = vld [vmem:[%s0 + $0x18] sm:$0xff]
  %v25 = vld [vmem:[%s0 + $0x20] sm:$0xff]
  %v26 = vld [vmem:[%s0 + $0x28] sm:$0xff]
  %v27 = vld [vmem:[%s0 + $0x30] sm:$0xff]
  %v28 = vld [vmem:[%s0 + $0x38] sm:$0xff]
  %v29 = vld [vmem:[%s0 + $0x40] sm:$0xff]
  %v30 = vld [vmem:[%s0 + $0x48] sm:$0xff]
  %v31 = vld [vmem:[%s0 + $0x50] sm:$0xff]
  %v32 = vld [vmem:[%s0 + $0x58] sm:$0xff]
  %v33 = vld [vmem:[%s0 + $0x60] sm:$0xff]
  %v34 = vld [vmem:[%s0 + $0x68] sm:$0xff]
  %v35 = vld [vmem:[%s0 + $0x70] sm:$0xff]
  %v36 = vld [vmem:[%s0 + $0x78] sm:$0xff]
  %v37 = vld [vmem:[%s1] sm:$0xff]
  %v38 = vld [vmem:[%s1 + $0x8] sm:$0xff]
  %v39 = vld [vmem:[%s1 + $0x10] sm:$0xff]
  %v40 = vld [vmem:[%s1 + $0x18] sm:$0xff]
  %v41 = vld [vmem:[%s2] sm:$0x1]
  %v43 = vlaneseq
  %v44 = vshrl.u32 %v43, 7
  %v45 = vsub.s32 0, %v44
  %v46 = vrot.slane %v41, %v45
  %vm48 = vcmask 261120
  %v50 = vsel %vm48, %v21, 0
  %v53 = vsel %vm48, %v22, 0
  %v56 = vsel %vm48, %v23, 0
  %v59 = vsel %vm48, %v24, 0
  %v62 = vsel %vm48, %v25, 0
  %v65 = vsel %vm48, %v26, 0
  %v68 = vsel %vm48, %v27, 0
  %v71 = vsel %vm48, %v28, 0
  %v74 = vsel %vm48, %v29, 0
  %v77 = vsel %vm48, %v30, 0
  %v80 = vsel %vm48, %v31, 0
  %v83 = vsel %vm48, %v32, 0
  %v86 = vsel %vm48, %v33, 0
  %v89 = vsel %vm48, %v34, 0
  %v92 = vsel %vm48, %v35, 0
  %v95 = vsel %vm48, %v36, 0
  %97 = vmatprep.subr.mxu0 0.0
  %v98 = vand.u32 %v37, 4294901760
  %99 = vmatpush1.msra.mxu0 %v98
  %100 = vmatprep.subr.mxu0 0.0
  %v101 = vand.u32 %v38, 4294901760
  %102 = vmatpush1.msra.mxu0 %v101
  %103 = vmatprep.subr.mxu0 0.0
  %v104 = vand.u32 %v39, 4294901760
  %105 = vmatpush1.msra.mxu0 %v104
  %106 = vmatprep.subr.mxu0 0.0
  %v107 = vand.u32 %v40, 4294901760
  %108 = vmatpush1.msra.mxu0 %v107
  %109 = vmatprep.subr.mxu0 0.0
  %110 = vmatpush1.msra.mxu0 0.0
  %111 = vmatprep.subr.mxu0 0.0
  %112 = vmatpush1.msra.mxu0 0.0
  %113 = vmatprep.subr.mxu0 0.0
  %114 = vmatpush1.msra.mxu0 0.0
  %115 = vmatprep.subr.mxu0 0.0
  %116 = vmatpush1.msra.mxu0 0.0
  %117 = vmatprep.subr.mxu0 0.0
  %118 = vmatpush1.msra.mxu0 0.0
  %119 = vmatprep.subr.mxu0 0.0
  %120 = vmatpush1.msra.mxu0 0.0
  %121 = vmatprep.subr.mxu0 0.0
  %122 = vmatpush1.msra.mxu0 0.0
  %123 = vmatprep.subr.mxu0 0.0
  %124 = vmatpush1.msra.mxu0 0.0
  %125 = vmatprep.subr.mxu0 0.0
  %126 = vmatpush1.msra.mxu0 0.0
  %127 = vmatprep.subr.mxu0 0.0
  %128 = vmatpush1.msra.mxu0 0.0
  %129 = vmatprep.subr.mxu0 0.0
  %130 = vmatpush1.msra.mxu0 0.0
  %131 = vmatprep.subr.mxu0 0.0
  %132 = vmatpush1.msra.mxu0 0.0
  %133 = vmatprep.subr.mxu0 0.0
  %134 = vmatpush1.msra.mxu0 0.0
  %135 = vmatprep.subr.mxu0 0.0
  %136 = vmatpush1.msra.mxu0 0.0
  %137 = vmatprep.subr.mxu0 0.0
  %138 = vmatpush1.msra.mxu0 0.0
  %139 = vmatprep.subr.mxu0 0.0
  %140 = vmatpush1.msra.mxu0 0.0
  %141 = vmatprep.subr.mxu0 0.0
  %142 = vmatpush1.msra.mxu0 0.0
  %143 = vmatprep.subr.mxu0 0.0
  %144 = vmatpush1.msra.mxu0 0.0
  %145 = vmatprep.subr.mxu0 0.0
  %146 = vmatpush1.msra.mxu0 0.0
  %147 = vmatprep.subr.mxu0 0.0
  %148 = vmatpush1.msra.mxu0 0.0
  %149 = vmatprep.subr.mxu0 0.0
  %150 = vmatpush1.msra.mxu0 0.0
  %151 = vmatprep.subr.mxu0 0.0
  %152 = vmatpush1.msra.mxu0 0.0
  %153 = vmatprep.subr.mxu0 0.0
  %154 = vmatpush1.msra.mxu0 0.0
  %155 = vmatprep.subr.mxu0 0.0
  %156 = vmatpush1.msra.mxu0 0.0
  %157 = vmatprep.subr.mxu0 0.0
  %158 = vmatpush1.msra.mxu0 0.0
  %159 = vmatprep.subr.mxu0 0.0
  %160 = vmatpush1.msra.mxu0 0.0
  %161 = vmatprep.subr.mxu0 0.0
  %162 = vmatpush1.msra.mxu0 0.0
  %163 = vmatprep.subr.mxu0 0.0
  %164 = vmatpush1.msra.mxu0 0.0
  %165 = vmatprep.mubr.f32.mxu0 0.0
  %v166 = vand.u32 %v50, 4294901760
  %v167 = vsub.f32 %v50, %v166
  %v168 = vand.u32 %v167, 4294901760
  %v169 = vsub.f32 %v167, %v168
  %v170 = vand.u32 %v169, 4294901760
  %171 = vmatmul.mubr.f32.gmra.mrb[0].mxu0 %v170
  %v172 = vpop.f32.mrb[0].mxu0
  %v173 = vadd.f32 %v46, %v172
  %v174 = vpop.f32.mrb[0].mxu0
  %175 = vmatprep.mubr.f32.mxu0 0.0
  %v176 = vand.u32 %v53, 4294901760
  %v177 = vsub.f32 %v53, %v176
  %v178 = vand.u32 %v177, 4294901760
  %v179 = vsub.f32 %v177, %v178
  %v180 = vand.u32 %v179, 4294901760
  %181 = vmatmul.mubr.f32.gmra.mrb[0].mxu0 %v180
  %v182 = vpop.f32.mrb[0].mxu0
  %v183 = vadd.f32 %v46, %v182
  %v184 = vpop.f32.mrb[0].mxu0
  %185 = vmatprep.mubr.f32.mxu0 0.0
  %v186 = vand.u32 %v56, 4294901760
  %v187 = vsub.f32 %v56, %v186
  %v188 = vand.u32 %v187, 4294901760
  %v189 = vsub.f32 %v187, %v188
  %v190 = vand.u32 %v189, 4294901760
  %191 = vmatmul.mubr.f32.gmra.mrb[0].mxu0 %v190
  %v192 = vpop.f32.mrb[0].mxu0
  %v193 = vadd.f32 %v46, %v192
  %v194 = vpop.f32.mrb[0].mxu0
  %195 = vmatprep.mubr.f32.mxu0 0.0
  %v196 = vand.u32 %v59, 4294901760
  %v197 = vsub.f32 %v59, %v196
  %v198 = vand.u32 %v197, 4294901760
  %v199 = vsub.f32 %v197, %v198
  %v200 = vand.u32 %v199, 4294901760
  %201 = vmatmul.mubr.f32.gmra.mrb[0].mxu0 %v200
  %v202 = vpop.f32.mrb[0].mxu0
  %v203 = vadd.f32 %v46, %v202
  %v204 = vpop.f32.mrb[0].mxu0
  %205 = vmatprep.mubr.f32.mxu0 0.0
  %v206 = vand.u32 %v62, 4294901760
  %v207 = vsub.f32 %v62, %v206
  %v208 = vand.u32 %v207, 4294901760
  %v209 = vsub.f32 %v207, %v208
  %v210 = vand.u32 %v209, 4294901760
  %211 = vmatmul.mubr.f32.gmra.mrb[0].mxu0 %v210
  %v212 = vpop.f32.mrb[0].mxu0
  %v213 = vadd.f32 %v46, %v212
  %v214 = vpop.f32.mrb[0].mxu0
  %215 = vmatprep.mubr.f32.mxu0 0.0
  %v216 = vand.u32 %v65, 4294901760
  %v217 = vsub.f32 %v65, %v216
  %v218 = vand.u32 %v217, 4294901760
  %v219 = vsub.f32 %v217, %v218
  %v220 = vand.u32 %v219, 4294901760
  %221 = vmatmul.mubr.f32.gmra.mrb[0].mxu0 %v220
  %v222 = vpop.f32.mrb[0].mxu0
  %v223 = vadd.f32 %v46, %v222
  %v224 = vpop.f32.mrb[0].mxu0
  %225 = vmatprep.mubr.f32.mxu0 0.0
  %v226 = vand.u32 %v68, 4294901760
  %v227 = vsub.f32 %v68, %v226
  %v228 = vand.u32 %v227, 4294901760
  %v229 = vsub.f32 %v227, %v228
  %v230 = vand.u32 %v229, 4294901760
  %231 = vmatmul.mubr.f32.gmra.mrb[0].mxu0 %v230
  %v232 = vpop.f32.mrb[0].mxu0
  %v233 = vadd.f32 %v46, %v232
  %v234 = vpop.f32.mrb[0].mxu0
  %235 = vmatprep.mubr.f32.mxu0 0.0
  %v236 = vand.u32 %v71, 4294901760
  %v237 = vsub.f32 %v71, %v236
  %v238 = vand.u32 %v237, 4294901760
  %v239 = vsub.f32 %v237, %v238
  %v240 = vand.u32 %v239, 4294901760
  %241 = vmatmul.mubr.f32.gmra.mrb[0].mxu0 %v240
  %v242 = vpop.f32.mrb[0].mxu0
  %v243 = vadd.f32 %v46, %v242
  %v244 = vpop.f32.mrb[0].mxu0
  %245 = vmatprep.mubr.f32.mxu0 0.0
  %v246 = vand.u32 %v74, 4294901760
  %v247 = vsub.f32 %v74, %v246
  %v248 = vand.u32 %v247, 4294901760
  %v249 = vsub.f32 %v247, %v248
  %v250 = vand.u32 %v249, 4294901760
  %251 = vmatmul.mubr.f32.gmra.mrb[0].mxu0 %v250
  %v252 = vpop.f32.mrb[0].mxu0
  %v253 = vadd.f32 %v46, %v252
  %v254 = vpop.f32.mrb[0].mxu0
  %255 = vmatprep.mubr.f32.mxu0 0.0
  %v256 = vand.u32 %v77, 4294901760
  %v257 = vsub.f32 %v77, %v256
  %v258 = vand.u32 %v257, 4294901760
  %v259 = vsub.f32 %v257, %v258
  %v260 = vand.u32 %v259, 4294901760
  %261 = vmatmul.mubr.f32.gmra.mrb[0].mxu0 %v260
  %v262 = vpop.f32.mrb[0].mxu0
  %v263 = vadd.f32 %v46, %v262
  %v264 = vpop.f32.mrb[0].mxu0
  %265 = vmatprep.mubr.f32.mxu0 0.0
  %v266 = vand.u32 %v80, 4294901760
  %v267 = vsub.f32 %v80, %v266
  %v268 = vand.u32 %v267, 4294901760
  %v269 = vsub.f32 %v267, %v268
  %v270 = vand.u32 %v269, 4294901760
  %271 = vmatmul.mubr.f32.gmra.mrb[0].mxu0 %v270
  %v272 = vpop.f32.mrb[0].mxu0
  %v273 = vadd.f32 %v46, %v272
  %v274 = vpop.f32.mrb[0].mxu0
  %275 = vmatprep.mubr.f32.mxu0 0.0
  %v276 = vand.u32 %v83, 4294901760
  %v277 = vsub.f32 %v83, %v276
  %v278 = vand.u32 %v277, 4294901760
  %v279 = vsub.f32 %v277, %v278
  %v280 = vand.u32 %v279, 4294901760
  %281 = vmatmul.mubr.f32.gmra.mrb[0].mxu0 %v280
  %v282 = vpop.f32.mrb[0].mxu0
  %v283 = vadd.f32 %v46, %v282
  %v284 = vpop.f32.mrb[0].mxu0
  %285 = vmatprep.mubr.f32.mxu0 0.0
  %v286 = vand.u32 %v86, 4294901760
  %v287 = vsub.f32 %v86, %v286
  %v288 = vand.u32 %v287, 4294901760
  %v289 = vsub.f32 %v287, %v288
  %v290 = vand.u32 %v289, 4294901760
  %291 = vmatmul.mubr.f32.gmra.mrb[0].mxu0 %v290
  %v292 = vpop.f32.mrb[0].mxu0
  %v293 = vadd.f32 %v46, %v292
  %v294 = vpop.f32.mrb[0].mxu0
  %295 = vmatprep.mubr.f32.mxu0 0.0
  %v296 = vand.u32 %v89, 4294901760
  %v297 = vsub.f32 %v89, %v296
  %v298 = vand.u32 %v297, 4294901760
  %v299 = vsub.f32 %v297, %v298
  %v300 = vand.u32 %v299, 4294901760
  %301 = vmatmul.mubr.f32.gmra.mrb[0].mxu0 %v300
  %v302 = vpop.f32.mrb[0].mxu0
  %v303 = vadd.f32 %v46, %v302
  %v304 = vpop.f32.mrb[0].mxu0
  %305 = vmatprep.mubr.f32.mxu0 0.0
  %v306 = vand.u32 %v92, 4294901760
  %v307 = vsub.f32 %v92, %v306
  %v308 = vand.u32 %v307, 4294901760
  %v309 = vsub.f32 %v307, %v308
  %v310 = vand.u32 %v309, 4294901760
  %311 = vmatmul.mubr.f32.gmra.mrb[0].mxu0 %v310
  %v312 = vpop.f32.mrb[0].mxu0
  %v313 = vadd.f32 %v46, %v312
  %v314 = vpop.f32.mrb[0].mxu0
  %315 = vmatprep.mubr.f32.mxu0 0.0
  %v316 = vand.u32 %v95, 4294901760
  %v317 = vsub.f32 %v95, %v316
  %v318 = vand.u32 %v317, 4294901760
  %v319 = vsub.f32 %v317, %v318
  %v320 = vand.u32 %v319, 4294901760
  %321 = vmatmul.mubr.f32.gmra.mrb[0].mxu0 %v320
  %v322 = vpop.f32.mrb[0].mxu0
  %v323 = vadd.f32 %v46, %v322
  %v324 = vpop.f32.mrb[0].mxu0
  %325 = vdwg.mxu0
  %326 = vmatprep.subr.mxu0 0.0
  %v327 = vand.u32 %v37, 4294901760
  %v328 = vsub.f32 %v37, %v327
  %v329 = vand.u32 %v328, 4294901760
  %v330 = vsub.f32 %v328, %v329
  %v331 = vand.u32 %v330, 4294901760
  %332 = vmatpush1.msra.mxu0 %v331
  %333 = vmatprep.subr.mxu0 0.0
  %v334 = vand.u32 %v38, 4294901760
  %v335 = vsub.f32 %v38, %v334
  %v336 = vand.u32 %v335, 4294901760
  %v337 = vsub.f32 %v335, %v336
  %v338 = vand.u32 %v337, 4294901760
  %339 = vmatpush1.msra.mxu0 %v338
  %340 = vmatprep.subr.mxu0 0.0
  %v341 = vand.u32 %v39, 4294901760
  %v342 = vsub.f32 %v39, %v341
  %v343 = vand.u32 %v342, 4294901760
  %v344 = vsub.f32 %v342, %v343
  %v345 = vand.u32 %v344, 4294901760
  %346 = vmatpush1.msra.mxu0 %v345
  %347 = vmatprep.subr.mxu0 0.0
  %v348 = vand.u32 %v40, 4294901760
  %v349 = vsub.f32 %v40, %v348
  %v350 = vand.u32 %v349, 4294901760
  %v351 = vsub.f32 %v349, %v350
  %v352 = vand.u32 %v351, 4294901760
  %353 = vmatpush1.msra.mxu0 %v352
  %354 = vmatprep.subr.mxu0 0.0
  %355 = vmatpush1.msra.mxu0 0.0
  %356 = vmatprep.subr.mxu0 0.0
  %357 = vmatpush1.msra.mxu0 0.0
  %358 = vmatprep.subr.mxu0 0.0
  %359 = vmatpush1.msra.mxu0 0.0
  %360 = vmatprep.subr.mxu0 0.0
  %361 = vmatpush1.msra.mxu0 0.0
  %362 = vmatprep.subr.mxu0 0.0
  %363 = vmatpush1.msra.mxu0 0.0
  %364 = vmatprep.subr.mxu0 0.0
  %365 = vmatpush1.msra.mxu0 0.0
  %366 = vmatprep.subr.mxu0 0.0
  %367 = vmatpush1.msra.mxu0 0.0
  %368 = vmatprep.subr.mxu0 0.0
  %369 = vmatpush1.msra.mxu0 0.0
  %370 = vmatprep.subr.mxu0 0.0
  %371 = vmatpush1.msra.mxu0 0.0
  %372 = vmatprep.subr.mxu0 0.0
  %373 = vmatpush1.msra.mxu0 0.0
  %374 = vmatprep.subr.mxu0 0.0
  %375 = vmatpush1.msra.mxu0 0.0
  %376 = vmatprep.subr.mxu0 0.0
  %377 = vmatpush1.msra.mxu0 0.0
  %378 = vmatprep.subr.mxu0 0.0
  %379 = vmatpush1.msra.mxu0 0.0
  %380 = vmatprep.subr.mxu0 0.0
  %381 = vmatpush1.msra.mxu0 0.0
  %382 = vmatprep.subr.mxu0 0.0
  %383 = vmatpush1.msra.mxu0 0.0
  %384 = vmatprep.subr.mxu0 0.0
  %385 = vmatpush1.msra.mxu0 0.0
  %386 = vmatprep.subr.mxu0 0.0
  %387 = vmatpush1.msra.mxu0 0.0
  %388 = vmatprep.subr.mxu0 0.0
  %389 = vmatpush1.msra.mxu0 0.0
  %390 = vmatprep.subr.mxu0 0.0
  %391 = vmatpush1.msra.mxu0 0.0
  %392 = vmatprep.subr.mxu0 0.0
  %393 = vmatpush1.msra.mxu0 0.0
  %394 = vmatprep.subr.mxu0 0.0
  %395 = vmatpush1.msra.mxu0 0.0
  %396 = vmatprep.subr.mxu0 0.0
  %397 = vmatpush1.msra.mxu0 0.0
  %398 = vmatprep.subr.mxu0 0.0
  %399 = vmatpush1.msra.mxu0 0.0
  %400 = vmatprep.subr.mxu0 0.0
  %401 = vmatpush1.msra.mxu0 0.0
  %402 = vmatprep.subr.mxu0 0.0
  %403 = vmatpush1.msra.mxu0 0.0
  %404 = vmatprep.subr.mxu0 0.0
  %405 = vmatpush1.msra.mxu0 0.0
  %406 = vmatprep.subr.mxu0 0.0
  %407 = vmatpush1.msra.mxu0 0.0
  %408 = vmatprep.subr.mxu0 0.0
  %409 = vmatpush1.msra.mxu0 0.0
  %410 = vmatprep.mubr.f32.mxu0 0.0
  %v411 = vand.u32 %v50, 4294901760
  %412 = vmatmul.mubr.f32.gmra.mrb[0].mxu0 %v411
  %v413 = vpop.f32.mrb[0].mxu0
  %v414 = vadd.f32 %v173, %v413
  %v415 = vpop.f32.mrb[0].mxu0
  %416 = vmatprep.mubr.f32.mxu0 0.0
  %v417 = vand.u32 %v53, 4294901760
  %418 = vmatmul.mubr.f32.gmra.mrb[0].mxu0 %v417
  %v419 = vpop.f32.mrb[0].mxu0
  %v420 = vadd.f32 %v183, %v419
  %v421 = vpop.f32.mrb[0].mxu0
  %422 = vmatprep.mubr.f32.mxu0 0.0
  %v423 = vand.u32 %v56, 4294901760
  %424 = vmatmul.mubr.f32.gmra.mrb[0].mxu0 %v423
  %v425 = vpop.f32.mrb[0].mxu0
  %v426 = vadd.f32 %v193, %v425
  %v427 = vpop.f32.mrb[0].mxu0
  %428 = vmatprep.mubr.f32.mxu0 0.0
  %v429 = vand.u32 %v59, 4294901760
  %430 = vmatmul.mubr.f32.gmra.mrb[0].mxu0 %v429
  %v431 = vpop.f32.mrb[0].mxu0
  %v432 = vadd.f32 %v203, %v431
  %v433 = vpop.f32.mrb[0].mxu0
  %434 = vmatprep.mubr.f32.mxu0 0.0
  %v435 = vand.u32 %v62, 4294901760
  %436 = vmatmul.mubr.f32.gmra.mrb[0].mxu0 %v435
  %v437 = vpop.f32.mrb[0].mxu0
  %v438 = vadd.f32 %v213, %v437
  %v439 = vpop.f32.mrb[0].mxu0
  %440 = vmatprep.mubr.f32.mxu0 0.0
  %v441 = vand.u32 %v65, 4294901760
  %442 = vmatmul.mubr.f32.gmra.mrb[0].mxu0 %v441
  %v443 = vpop.f32.mrb[0].mxu0
  %v444 = vadd.f32 %v223, %v443
  %v445 = vpop.f32.mrb[0].mxu0
  %446 = vmatprep.mubr.f32.mxu0 0.0
  %v447 = vand.u32 %v68, 4294901760
  %448 = vmatmul.mubr.f32.gmra.mrb[0].mxu0 %v447
  %v449 = vpop.f32.mrb[0].mxu0
  %v450 = vadd.f32 %v233, %v449
  %v451 = vpop.f32.mrb[0].mxu0
  %452 = vmatprep.mubr.f32.mxu0 0.0
  %v453 = vand.u32 %v71, 4294901760
  %454 = vmatmul.mubr.f32.gmra.mrb[0].mxu0 %v453
  %v455 = vpop.f32.mrb[0].mxu0
  %v456 = vadd.f32 %v243, %v455
  %v457 = vpop.f32.mrb[0].mxu0
  %458 = vmatprep.mubr.f32.mxu0 0.0
  %v459 = vand.u32 %v74, 4294901760
  %460 = vmatmul.mubr.f32.gmra.mrb[0].mxu0 %v459
  %v461 = vpop.f32.mrb[0].mxu0
  %v462 = vadd.f32 %v253, %v461
  %v463 = vpop.f32.mrb[0].mxu0
  %464 = vmatprep.mubr.f32.mxu0 0.0
  %v465 = vand.u32 %v77, 4294901760
  %466 = vmatmul.mubr.f32.gmra.mrb[0].mxu0 %v465
  %v467 = vpop.f32.mrb[0].mxu0
  %v468 = vadd.f32 %v263, %v467
  %v469 = vpop.f32.mrb[0].mxu0
  %470 = vmatprep.mubr.f32.mxu0 0.0
  %v471 = vand.u32 %v80, 4294901760
  %472 = vmatmul.mubr.f32.gmra.mrb[0].mxu0 %v471
  %v473 = vpop.f32.mrb[0].mxu0
  %v474 = vadd.f32 %v273, %v473
  %v475 = vpop.f32.mrb[0].mxu0
  %476 = vmatprep.mubr.f32.mxu0 0.0
  %v477 = vand.u32 %v83, 4294901760
  %478 = vmatmul.mubr.f32.gmra.mrb[0].mxu0 %v477
  %v479 = vpop.f32.mrb[0].mxu0
  %v480 = vadd.f32 %v283, %v479
  %v481 = vpop.f32.mrb[0].mxu0
  %482 = vmatprep.mubr.f32.mxu0 0.0
  %v483 = vand.u32 %v86, 4294901760
  %484 = vmatmul.mubr.f32.gmra.mrb[0].mxu0 %v483
  %v485 = vpop.f32.mrb[0].mxu0
  %v486 = vadd.f32 %v293, %v485
  %v487 = vpop.f32.mrb[0].mxu0
  %488 = vmatprep.mubr.f32.mxu0 0.0
  %v489 = vand.u32 %v89, 4294901760
  %490 = vmatmul.mubr.f32.gmra.mrb[0].mxu0 %v489
  %v491 = vpop.f32.mrb[0].mxu0
  %v492 = vadd.f32 %v303, %v491
  %v493 = vpop.f32.mrb[0].mxu0
  %494 = vmatprep.mubr.f32.mxu0 0.0
  %v495 = vand.u32 %v92, 4294901760
  %496 = vmatmul.mubr.f32.gmra.mrb[0].mxu0 %v495
  %v497 = vpop.f32.mrb[0].mxu0
  %v498 = vadd.f32 %v313, %v497
  %v499 = vpop.f32.mrb[0].mxu0
  %500 = vmatprep.mubr.f32.mxu0 0.0
  %v501 = vand.u32 %v95, 4294901760
  %502 = vmatmul.mubr.f32.gmra.mrb[0].mxu0 %v501
  %v503 = vpop.f32.mrb[0].mxu0
  %v504 = vadd.f32 %v323, %v503
  %v505 = vpop.f32.mrb[0].mxu0
  %506 = vdwg.mxu0
  %507 = vmatprep.subr.mxu0 0.0
  %v508 = vand.u32 %v37, 4294901760
  %v509 = vsub.f32 %v37, %v508
  %510 = vmatpush1.msra.mxu0 %v509
  %511 = vmatprep.subr.mxu0 0.0
  %v512 = vand.u32 %v38, 4294901760
  %v513 = vsub.f32 %v38, %v512
  %514 = vmatpush1.msra.mxu0 %v513
  %515 = vmatprep.subr.mxu0 0.0
  %v516 = vand.u32 %v39, 4294901760
  %v517 = vsub.f32 %v39, %v516
  %518 = vmatpush1.msra.mxu0 %v517
  %519 = vmatprep.subr.mxu0 0.0
  %v520 = vand.u32 %v40, 4294901760
  %v521 = vsub.f32 %v40, %v520
  %522 = vmatpush1.msra.mxu0 %v521
  %523 = vmatprep.subr.mxu0 0.0
  %524 = vmatpush1.msra.mxu0 0.0
  %525 = vmatprep.subr.mxu0 0.0
  %526 = vmatpush1.msra.mxu0 0.0
  %527 = vmatprep.subr.mxu0 0.0
  %528 = vmatpush1.msra.mxu0 0.0
  %529 = vmatprep.subr.mxu0 0.0
  %530 = vmatpush1.msra.mxu0 0.0
  %531 = vmatprep.subr.mxu0 0.0
  %532 = vmatpush1.msra.mxu0 0.0
  %533 = vmatprep.subr.mxu0 0.0
  %534 = vmatpush1.msra.mxu0 0.0
  %535 = vmatprep.subr.mxu0 0.0
  %536 = vmatpush1.msra.mxu0 0.0
  %537 = vmatprep.subr.mxu0 0.0
  %538 = vmatpush1.msra.mxu0 0.0
  %539 = vmatprep.subr.mxu0 0.0
  %540 = vmatpush1.msra.mxu0 0.0
  %541 = vmatprep.subr.mxu0 0.0
  %542 = vmatpush1.msra.mxu0 0.0
  %543 = vmatprep.subr.mxu0 0.0
  %544 = vmatpush1.msra.mxu0 0.0
  %545 = vmatprep.subr.mxu0 0.0
  %546 = vmatpush1.msra.mxu0 0.0
  %547 = vmatprep.subr.mxu0 0.0
  %548 = vmatpush1.msra.mxu0 0.0
  %549 = vmatprep.subr.mxu0 0.0
  %550 = vmatpush1.msra.mxu0 0.0
  %551 = vmatprep.subr.mxu0 0.0
  %552 = vmatpush1.msra.mxu0 0.0
  %553 = vmatprep.subr.mxu0 0.0
  %554 = vmatpush1.msra.mxu0 0.0
  %555 = vmatprep.subr.mxu0 0.0
  %556 = vmatpush1.msra.mxu0 0.0
  %557 = vmatprep.subr.mxu0 0.0
  %558 = vmatpush1.msra.mxu0 0.0
  %559 = vmatprep.subr.mxu0 0.0
  %560 = vmatpush1.msra.mxu0 0.0
  %561 = vmatprep.subr.mxu0 0.0
  %562 = vmatpush1.msra.mxu0 0.0
  %563 = vmatprep.subr.mxu0 0.0
  %564 = vmatpush1.msra.mxu0 0.0
  %565 = vmatprep.subr.mxu0 0.0
  %566 = vmatpush1.msra.mxu0 0.0
  %567 = vmatprep.subr.mxu0 0.0
  %568 = vmatpush1.msra.mxu0 0.0
  %569 = vmatprep.subr.mxu0 0.0
  %570 = vmatpush1.msra.mxu0 0.0
  %571 = vmatprep.subr.mxu0 0.0
  %572 = vmatpush1.msra.mxu0 0.0
  %573 = vmatprep.subr.mxu0 0.0
  %574 = vmatpush1.msra.mxu0 0.0
  %575 = vmatprep.subr.mxu0 0.0
  %576 = vmatpush1.msra.mxu0 0.0
  %577 = vmatprep.subr.mxu0 0.0
  %578 = vmatpush1.msra.mxu0 0.0
  %579 = vmatprep.mubr.f32.mxu0 0.0
  %v580 = vand.u32 %v50, 4294901760
  %v581 = vsub.f32 %v50, %v580
  %582 = vmatmul.mubr.f32.gmra.mrb[0].mxu0 %v581
  %v583 = vpop.f32.mrb[0].mxu0
  %v584 = vadd.f32 %v414, %v583
  %v585 = vpop.f32.mrb[0].mxu0
  %586 = vmatprep.mubr.f32.mxu0 0.0
  %v587 = vand.u32 %v53, 4294901760
  %v588 = vsub.f32 %v53, %v587
  %589 = vmatmul.mubr.f32.gmra.mrb[0].mxu0 %v588
  %v590 = vpop.f32.mrb[0].mxu0
  %v591 = vadd.f32 %v420, %v590
  %v592 = vpop.f32.mrb[0].mxu0
  %593 = vmatprep.mubr.f32.mxu0 0.0
  %v594 = vand.u32 %v56, 4294901760
  %v595 = vsub.f32 %v56, %v594
  %596 = vmatmul.mubr.f32.gmra.mrb[0].mxu0 %v595
  %v597 = vpop.f32.mrb[0].mxu0
  %v598 = vadd.f32 %v426, %v597
  %v599 = vpop.f32.mrb[0].mxu0
  %600 = vmatprep.mubr.f32.mxu0 0.0
  %v601 = vand.u32 %v59, 4294901760
  %v602 = vsub.f32 %v59, %v601
  %603 = vmatmul.mubr.f32.gmra.mrb[0].mxu0 %v602
  %v604 = vpop.f32.mrb[0].mxu0
  %v605 = vadd.f32 %v432, %v604
  %v606 = vpop.f32.mrb[0].mxu0
  %607 = vmatprep.mubr.f32.mxu0 0.0
  %v608 = vand.u32 %v62, 4294901760
  %v609 = vsub.f32 %v62, %v608
  %610 = vmatmul.mubr.f32.gmra.mrb[0].mxu0 %v609
  %v611 = vpop.f32.mrb[0].mxu0
  %v612 = vadd.f32 %v438, %v611
  %v613 = vpop.f32.mrb[0].mxu0
  %614 = vmatprep.mubr.f32.mxu0 0.0
  %v615 = vand.u32 %v65, 4294901760
  %v616 = vsub.f32 %v65, %v615
  %617 = vmatmul.mubr.f32.gmra.mrb[0].mxu0 %v616
  %v618 = vpop.f32.mrb[0].mxu0
  %v619 = vadd.f32 %v444, %v618
  %v620 = vpop.f32.mrb[0].mxu0
  %621 = vmatprep.mubr.f32.mxu0 0.0
  %v622 = vand.u32 %v68, 4294901760
  %v623 = vsub.f32 %v68, %v622
  %624 = vmatmul.mubr.f32.gmra.mrb[0].mxu0 %v623
  %v625 = vpop.f32.mrb[0].mxu0
  %v626 = vadd.f32 %v450, %v625
  %v627 = vpop.f32.mrb[0].mxu0
  %628 = vmatprep.mubr.f32.mxu0 0.0
  %v629 = vand.u32 %v71, 4294901760
  %v630 = vsub.f32 %v71, %v629
  %631 = vmatmul.mubr.f32.gmra.mrb[0].mxu0 %v630
  %v632 = vpop.f32.mrb[0].mxu0
  %v633 = vadd.f32 %v456, %v632
  %v634 = vpop.f32.mrb[0].mxu0
  %635 = vmatprep.mubr.f32.mxu0 0.0
  %v636 = vand.u32 %v74, 4294901760
  %v637 = vsub.f32 %v74, %v636
  %638 = vmatmul.mubr.f32.gmra.mrb[0].mxu0 %v637
  %v639 = vpop.f32.mrb[0].mxu0
  %v640 = vadd.f32 %v462, %v639
  %v641 = vpop.f32.mrb[0].mxu0
  %642 = vmatprep.mubr.f32.mxu0 0.0
  %v643 = vand.u32 %v77, 4294901760
  %v644 = vsub.f32 %v77, %v643
  %645 = vmatmul.mubr.f32.gmra.mrb[0].mxu0 %v644
  %v646 = vpop.f32.mrb[0].mxu0
  %v647 = vadd.f32 %v468, %v646
  %v648 = vpop.f32.mrb[0].mxu0
  %649 = vmatprep.mubr.f32.mxu0 0.0
  %v650 = vand.u32 %v80, 4294901760
  %v651 = vsub.f32 %v80, %v650
  %652 = vmatmul.mubr.f32.gmra.mrb[0].mxu0 %v651
  %v653 = vpop.f32.mrb[0].mxu0
  %v654 = vadd.f32 %v474, %v653
  %v655 = vpop.f32.mrb[0].mxu0
  %656 = vmatprep.mubr.f32.mxu0 0.0
  %v657 = vand.u32 %v83, 4294901760
  %v658 = vsub.f32 %v83, %v657
  %659 = vmatmul.mubr.f32.gmra.mrb[0].mxu0 %v658
  %v660 = vpop.f32.mrb[0].mxu0
  %v661 = vadd.f32 %v480, %v660
  %v662 = vpop.f32.mrb[0].mxu0
  %663 = vmatprep.mubr.f32.mxu0 0.0
  %v664 = vand.u32 %v86, 4294901760
  %v665 = vsub.f32 %v86, %v664
  %666 = vmatmul.mubr.f32.gmra.mrb[0].mxu0 %v665
  %v667 = vpop.f32.mrb[0].mxu0
  %v668 = vadd.f32 %v486, %v667
  %v669 = vpop.f32.mrb[0].mxu0
  %670 = vmatprep.mubr.f32.mxu0 0.0
  %v671 = vand.u32 %v89, 4294901760
  %v672 = vsub.f32 %v89, %v671
  %673 = vmatmul.mubr.f32.gmra.mrb[0].mxu0 %v672
  %v674 = vpop.f32.mrb[0].mxu0
  %v675 = vadd.f32 %v492, %v674
  %v676 = vpop.f32.mrb[0].mxu0
  %677 = vmatprep.mubr.f32.mxu0 0.0
  %v678 = vand.u32 %v92, 4294901760
  %v679 = vsub.f32 %v92, %v678
  %680 = vmatmul.mubr.f32.gmra.mrb[0].mxu0 %v679
  %v681 = vpop.f32.mrb[0].mxu0
  %v682 = vadd.f32 %v498, %v681
  %v683 = vpop.f32.mrb[0].mxu0
  %684 = vmatprep.mubr.f32.mxu0 0.0
  %v685 = vand.u32 %v95, 4294901760
  %v686 = vsub.f32 %v95, %v685
  %687 = vmatmul.mubr.f32.gmra.mrb[0].mxu0 %v686
  %v688 = vpop.f32.mrb[0].mxu0
  %v689 = vadd.f32 %v504, %v688
  %v690 = vpop.f32.mrb[0].mxu0
  %691 = vdwg.mxu0
  %692 = vmatprep.subr.mxu0 0.0
  %v693 = vand.u32 %v37, 4294901760
  %694 = vmatpush1.msra.mxu0 %v693
  %695 = vmatprep.subr.mxu0 0.0
  %v696 = vand.u32 %v38, 4294901760
  %697 = vmatpush1.msra.mxu0 %v696
  %698 = vmatprep.subr.mxu0 0.0
  %v699 = vand.u32 %v39, 4294901760
  %700 = vmatpush1.msra.mxu0 %v699
  %701 = vmatprep.subr.mxu0 0.0
  %v702 = vand.u32 %v40, 4294901760
  %703 = vmatpush1.msra.mxu0 %v702
  %704 = vmatprep.subr.mxu0 0.0
  %705 = vmatpush1.msra.mxu0 0.0
  %706 = vmatprep.subr.mxu0 0.0
  %707 = vmatpush1.msra.mxu0 0.0
  %708 = vmatprep.subr.mxu0 0.0
  %709 = vmatpush1.msra.mxu0 0.0
  %710 = vmatprep.subr.mxu0 0.0
  %711 = vmatpush1.msra.mxu0 0.0
  %712 = vmatprep.subr.mxu0 0.0
  %713 = vmatpush1.msra.mxu0 0.0
  %714 = vmatprep.subr.mxu0 0.0
  %715 = vmatpush1.msra.mxu0 0.0
  %716 = vmatprep.subr.mxu0 0.0
  %717 = vmatpush1.msra.mxu0 0.0
  %718 = vmatprep.subr.mxu0 0.0
  %719 = vmatpush1.msra.mxu0 0.0
  %720 = vmatprep.subr.mxu0 0.0
  %721 = vmatpush1.msra.mxu0 0.0
  %722 = vmatprep.subr.mxu0 0.0
  %723 = vmatpush1.msra.mxu0 0.0
  %724 = vmatprep.subr.mxu0 0.0
  %725 = vmatpush1.msra.mxu0 0.0
  %726 = vmatprep.subr.mxu0 0.0
  %727 = vmatpush1.msra.mxu0 0.0
  %728 = vmatprep.subr.mxu0 0.0
  %729 = vmatpush1.msra.mxu0 0.0
  %730 = vmatprep.subr.mxu0 0.0
  %731 = vmatpush1.msra.mxu0 0.0
  %732 = vmatprep.subr.mxu0 0.0
  %733 = vmatpush1.msra.mxu0 0.0
  %734 = vmatprep.subr.mxu0 0.0
  %735 = vmatpush1.msra.mxu0 0.0
  %736 = vmatprep.subr.mxu0 0.0
  %737 = vmatpush1.msra.mxu0 0.0
  %738 = vmatprep.subr.mxu0 0.0
  %739 = vmatpush1.msra.mxu0 0.0
  %740 = vmatprep.subr.mxu0 0.0
  %741 = vmatpush1.msra.mxu0 0.0
  %742 = vmatprep.subr.mxu0 0.0
  %743 = vmatpush1.msra.mxu0 0.0
  %744 = vmatprep.subr.mxu0 0.0
  %745 = vmatpush1.msra.mxu0 0.0
  %746 = vmatprep.subr.mxu0 0.0
  %747 = vmatpush1.msra.mxu0 0.0
  %748 = vmatprep.subr.mxu0 0.0
  %749 = vmatpush1.msra.mxu0 0.0
  %750 = vmatprep.subr.mxu0 0.0
  %751 = vmatpush1.msra.mxu0 0.0
  %752 = vmatprep.subr.mxu0 0.0
  %753 = vmatpush1.msra.mxu0 0.0
  %754 = vmatprep.subr.mxu0 0.0
  %755 = vmatpush1.msra.mxu0 0.0
  %756 = vmatprep.subr.mxu0 0.0
  %757 = vmatpush1.msra.mxu0 0.0
  %758 = vmatprep.subr.mxu0 0.0
  %759 = vmatpush1.msra.mxu0 0.0
  %760 = vmatprep.mubr.f32.mxu0 0.0
  %v761 = vand.u32 %v50, 4294901760
  %v762 = vsub.f32 %v50, %v761
  %v763 = vand.u32 %v762, 4294901760
  %764 = vmatmul.mubr.f32.gmra.mrb[0].mxu0 %v763
  %v765 = vpop.f32.mrb[0].mxu0
  %v766 = vadd.f32 %v584, %v765
  %v767 = vpop.f32.mrb[0].mxu0
  %768 = vmatprep.mubr.f32.mxu0 0.0
  %v769 = vand.u32 %v53, 4294901760
  %v770 = vsub.f32 %v53, %v769
  %v771 = vand.u32 %v770, 4294901760
  %772 = vmatmul.mubr.f32.gmra.mrb[0].mxu0 %v771
  %v773 = vpop.f32.mrb[0].mxu0
  %v774 = vadd.f32 %v591, %v773
  %v775 = vpop.f32.mrb[0].mxu0
  %776 = vmatprep.mubr.f32.mxu0 0.0
  %v777 = vand.u32 %v56, 4294901760
  %v778 = vsub.f32 %v56, %v777
  %v779 = vand.u32 %v778, 4294901760
  %780 = vmatmul.mubr.f32.gmra.mrb[0].mxu0 %v779
  %v781 = vpop.f32.mrb[0].mxu0
  %v782 = vadd.f32 %v598, %v781
  %v783 = vpop.f32.mrb[0].mxu0
  %784 = vmatprep.mubr.f32.mxu0 0.0
  %v785 = vand.u32 %v59, 4294901760
  %v786 = vsub.f32 %v59, %v785
  %v787 = vand.u32 %v786, 4294901760
  %788 = vmatmul.mubr.f32.gmra.mrb[0].mxu0 %v787
  %v789 = vpop.f32.mrb[0].mxu0
  %v790 = vadd.f32 %v605, %v789
  %v791 = vpop.f32.mrb[0].mxu0
  %792 = vmatprep.mubr.f32.mxu0 0.0
  %v793 = vand.u32 %v62, 4294901760
  %v794 = vsub.f32 %v62, %v793
  %v795 = vand.u32 %v794, 4294901760
  %796 = vmatmul.mubr.f32.gmra.mrb[0].mxu0 %v795
  %v797 = vpop.f32.mrb[0].mxu0
  %v798 = vadd.f32 %v612, %v797
  %v799 = vpop.f32.mrb[0].mxu0
  %800 = vmatprep.mubr.f32.mxu0 0.0
  %v801 = vand.u32 %v65, 4294901760
  %v802 = vsub.f32 %v65, %v801
  %v803 = vand.u32 %v802, 4294901760
  %804 = vmatmul.mubr.f32.gmra.mrb[0].mxu0 %v803
  %v805 = vpop.f32.mrb[0].mxu0
  %v806 = vadd.f32 %v619, %v805
  %v807 = vpop.f32.mrb[0].mxu0
  %808 = vmatprep.mubr.f32.mxu0 0.0
  %v809 = vand.u32 %v68, 4294901760
  %v810 = vsub.f32 %v68, %v809
  %v811 = vand.u32 %v810, 4294901760
  %812 = vmatmul.mubr.f32.gmra.mrb[0].mxu0 %v811
  %v813 = vpop.f32.mrb[0].mxu0
  %v814 = vadd.f32 %v626, %v813
  %v815 = vpop.f32.mrb[0].mxu0
  %816 = vmatprep.mubr.f32.mxu0 0.0
  %v817 = vand.u32 %v71, 4294901760
  %v818 = vsub.f32 %v71, %v817
  %v819 = vand.u32 %v818, 4294901760
  %820 = vmatmul.mubr.f32.gmra.mrb[0].mxu0 %v819
  %v821 = vpop.f32.mrb[0].mxu0
  %v822 = vadd.f32 %v633, %v821
  %v823 = vpop.f32.mrb[0].mxu0
  %824 = vmatprep.mubr.f32.mxu0 0.0
  %v825 = vand.u32 %v74, 4294901760
  %v826 = vsub.f32 %v74, %v825
  %v827 = vand.u32 %v826, 4294901760
  %828 = vmatmul.mubr.f32.gmra.mrb[0].mxu0 %v827
  %v829 = vpop.f32.mrb[0].mxu0
  %v830 = vadd.f32 %v640, %v829
  %v831 = vpop.f32.mrb[0].mxu0
  %832 = vmatprep.mubr.f32.mxu0 0.0
  %v833 = vand.u32 %v77, 4294901760
  %v834 = vsub.f32 %v77, %v833
  %v835 = vand.u32 %v834, 4294901760
  %836 = vmatmul.mubr.f32.gmra.mrb[0].mxu0 %v835
  %v837 = vpop.f32.mrb[0].mxu0
  %v838 = vadd.f32 %v647, %v837
  %v839 = vpop.f32.mrb[0].mxu0
  %840 = vmatprep.mubr.f32.mxu0 0.0
  %v841 = vand.u32 %v80, 4294901760
  %v842 = vsub.f32 %v80, %v841
  %v843 = vand.u32 %v842, 4294901760
  %844 = vmatmul.mubr.f32.gmra.mrb[0].mxu0 %v843
  %v845 = vpop.f32.mrb[0].mxu0
  %v846 = vadd.f32 %v654, %v845
  %v847 = vpop.f32.mrb[0].mxu0
  %848 = vmatprep.mubr.f32.mxu0 0.0
  %v849 = vand.u32 %v83, 4294901760
  %v850 = vsub.f32 %v83, %v849
  %v851 = vand.u32 %v850, 4294901760
  %852 = vmatmul.mubr.f32.gmra.mrb[0].mxu0 %v851
  %v853 = vpop.f32.mrb[0].mxu0
  %v854 = vadd.f32 %v661, %v853
  %v855 = vpop.f32.mrb[0].mxu0
  %856 = vmatprep.mubr.f32.mxu0 0.0
  %v857 = vand.u32 %v86, 4294901760
  %v858 = vsub.f32 %v86, %v857
  %v859 = vand.u32 %v858, 4294901760
  %860 = vmatmul.mubr.f32.gmra.mrb[0].mxu0 %v859
  %v861 = vpop.f32.mrb[0].mxu0
  %v862 = vadd.f32 %v668, %v861
  %v863 = vpop.f32.mrb[0].mxu0
  %864 = vmatprep.mubr.f32.mxu0 0.0
  %v865 = vand.u32 %v89, 4294901760
  %v866 = vsub.f32 %v89, %v865
  %v867 = vand.u32 %v866, 4294901760
  %868 = vmatmul.mubr.f32.gmra.mrb[0].mxu0 %v867
  %v869 = vpop.f32.mrb[0].mxu0
  %v870 = vadd.f32 %v675, %v869
  %v871 = vpop.f32.mrb[0].mxu0
  %872 = vmatprep.mubr.f32.mxu0 0.0
  %v873 = vand.u32 %v92, 4294901760
  %v874 = vsub.f32 %v92, %v873
  %v875 = vand.u32 %v874, 4294901760
  %876 = vmatmul.mubr.f32.gmra.mrb[0].mxu0 %v875
  %v877 = vpop.f32.mrb[0].mxu0
  %v878 = vadd.f32 %v682, %v877
  %v879 = vpop.f32.mrb[0].mxu0
  %880 = vmatprep.mubr.f32.mxu0 0.0
  %v881 = vand.u32 %v95, 4294901760
  %v882 = vsub.f32 %v95, %v881
  %v883 = vand.u32 %v882, 4294901760
  %884 = vmatmul.mubr.f32.gmra.mrb[0].mxu0 %v883
  %v885 = vpop.f32.mrb[0].mxu0
  %v886 = vadd.f32 %v689, %v885
  %v887 = vpop.f32.mrb[0].mxu0
  %888 = vdwg.mxu0
  %889 = vmatprep.subr.mxu0 0.0
  %v890 = vand.u32 %v37, 4294901760
  %v891 = vsub.f32 %v37, %v890
  %v892 = vand.u32 %v891, 4294901760
  %893 = vmatpush1.msra.mxu0 %v892
  %894 = vmatprep.subr.mxu0 0.0
  %v895 = vand.u32 %v38, 4294901760
  %v896 = vsub.f32 %v38, %v895
  %v897 = vand.u32 %v896, 4294901760
  %898 = vmatpush1.msra.mxu0 %v897
  %899 = vmatprep.subr.mxu0 0.0
  %v900 = vand.u32 %v39, 4294901760
  %v901 = vsub.f32 %v39, %v900
  %v902 = vand.u32 %v901, 4294901760
  %903 = vmatpush1.msra.mxu0 %v902
  %904 = vmatprep.subr.mxu0 0.0
  %v905 = vand.u32 %v40, 4294901760
  %v906 = vsub.f32 %v40, %v905
  %v907 = vand.u32 %v906, 4294901760
  %908 = vmatpush1.msra.mxu0 %v907
  %909 = vmatprep.subr.mxu0 0.0
  %910 = vmatpush1.msra.mxu0 0.0
  %911 = vmatprep.subr.mxu0 0.0
  %912 = vmatpush1.msra.mxu0 0.0
  %913 = vmatprep.subr.mxu0 0.0
  %914 = vmatpush1.msra.mxu0 0.0
  %915 = vmatprep.subr.mxu0 0.0
  %916 = vmatpush1.msra.mxu0 0.0
  %917 = vmatprep.subr.mxu0 0.0
  %918 = vmatpush1.msra.mxu0 0.0
  %919 = vmatprep.subr.mxu0 0.0
  %920 = vmatpush1.msra.mxu0 0.0
  %921 = vmatprep.subr.mxu0 0.0
  %922 = vmatpush1.msra.mxu0 0.0
  %923 = vmatprep.subr.mxu0 0.0
  %924 = vmatpush1.msra.mxu0 0.0
  %925 = vmatprep.subr.mxu0 0.0
  %926 = vmatpush1.msra.mxu0 0.0
  %927 = vmatprep.subr.mxu0 0.0
  %928 = vmatpush1.msra.mxu0 0.0
  %929 = vmatprep.subr.mxu0 0.0
  %930 = vmatpush1.msra.mxu0 0.0
  %931 = vmatprep.subr.mxu0 0.0
  %932 = vmatpush1.msra.mxu0 0.0
  %933 = vmatprep.subr.mxu0 0.0
  %934 = vmatpush1.msra.mxu0 0.0
  %935 = vmatprep.subr.mxu0 0.0
  %936 = vmatpush1.msra.mxu0 0.0
  %937 = vmatprep.subr.mxu0 0.0
  %938 = vmatpush1.msra.mxu0 0.0
  %939 = vmatprep.subr.mxu0 0.0
  %940 = vmatpush1.msra.mxu0 0.0
  %941 = vmatprep.subr.mxu0 0.0
  %942 = vmatpush1.msra.mxu0 0.0
  %943 = vmatprep.subr.mxu0 0.0
  %944 = vmatpush1.msra.mxu0 0.0
  %945 = vmatprep.subr.mxu0 0.0
  %946 = vmatpush1.msra.mxu0 0.0
  %947 = vmatprep.subr.mxu0 0.0
  %948 = vmatpush1.msra.mxu0 0.0
  %949 = vmatprep.subr.mxu0 0.0
  %950 = vmatpush1.msra.mxu0 0.0
  %951 = vmatprep.subr.mxu0 0.0
  %952 = vmatpush1.msra.mxu0 0.0
  %953 = vmatprep.subr.mxu0 0.0
  %954 = vmatpush1.msra.mxu0 0.0
  %955 = vmatprep.subr.mxu0 0.0
  %956 = vmatpush1.msra.mxu0 0.0
  %957 = vmatprep.subr.mxu0 0.0
  %958 = vmatpush1.msra.mxu0 0.0
  %959 = vmatprep.subr.mxu0 0.0
  %960 = vmatpush1.msra.mxu0 0.0
  %961 = vmatprep.subr.mxu0 0.0
  %962 = vmatpush1.msra.mxu0 0.0
  %963 = vmatprep.subr.mxu0 0.0
  %964 = vmatpush1.msra.mxu0 0.0
  %965 = vmatprep.mubr.f32.mxu0 0.0
  %v966 = vand.u32 %v50, 4294901760
  %967 = vmatmul.mubr.f32.gmra.mrb[0].mxu0 %v966
  %v968 = vpop.f32.mrb[0].mxu0
  %v969 = vadd.f32 %v766, %v968
  %v970 = vpop.f32.mrb[0].mxu0
  %971 = vmatprep.mubr.f32.mxu0 0.0
  %v972 = vand.u32 %v53, 4294901760
  %973 = vmatmul.mubr.f32.gmra.mrb[0].mxu0 %v972
  %v974 = vpop.f32.mrb[0].mxu0
  %v975 = vadd.f32 %v774, %v974
  %v976 = vpop.f32.mrb[0].mxu0
  %977 = vmatprep.mubr.f32.mxu0 0.0
  %v978 = vand.u32 %v56, 4294901760
  %979 = vmatmul.mubr.f32.gmra.mrb[0].mxu0 %v978
  %v980 = vpop.f32.mrb[0].mxu0
  %v981 = vadd.f32 %v782, %v980
  %v982 = vpop.f32.mrb[0].mxu0
  %983 = vmatprep.mubr.f32.mxu0 0.0
  %v984 = vand.u32 %v59, 4294901760
  %985 = vmatmul.mubr.f32.gmra.mrb[0].mxu0 %v984
  %v986 = vpop.f32.mrb[0].mxu0
  %v987 = vadd.f32 %v790, %v986
  %v988 = vpop.f32.mrb[0].mxu0
  %989 = vmatprep.mubr.f32.mxu0 0.0
  %v990 = vand.u32 %v62, 4294901760
  %991 = vmatmul.mubr.f32.gmra.mrb[0].mxu0 %v990
  %v992 = vpop.f32.mrb[0].mxu0
  %v993 = vadd.f32 %v798, %v992
  %v994 = vpop.f32.mrb[0].mxu0
  %995 = vmatprep.mubr.f32.mxu0 0.0
  %v996 = vand.u32 %v65, 4294901760
  %997 = vmatmul.mubr.f32.gmra.mrb[0].mxu0 %v996
  %v998 = vpop.f32.mrb[0].mxu0
  %v999 = vadd.f32 %v806, %v998
  %v1000 = vpop.f32.mrb[0].mxu0
  %1001 = vmatprep.mubr.f32.mxu0 0.0
  %v1002 = vand.u32 %v68, 4294901760
  %1003 = vmatmul.mubr.f32.gmra.mrb[0].mxu0 %v1002
  %v1004 = vpop.f32.mrb[0].mxu0
  %v1005 = vadd.f32 %v814, %v1004
  %v1006 = vpop.f32.mrb[0].mxu0
  %1007 = vmatprep.mubr.f32.mxu0 0.0
  %v1008 = vand.u32 %v71, 4294901760
  %1009 = vmatmul.mubr.f32.gmra.mrb[0].mxu0 %v1008
  %v1010 = vpop.f32.mrb[0].mxu0
  %v1011 = vadd.f32 %v822, %v1010
  %v1012 = vpop.f32.mrb[0].mxu0
  %1013 = vmatprep.mubr.f32.mxu0 0.0
  %v1014 = vand.u32 %v74, 4294901760
  %1015 = vmatmul.mubr.f32.gmra.mrb[0].mxu0 %v1014
  %v1016 = vpop.f32.mrb[0].mxu0
  %v1017 = vadd.f32 %v830, %v1016
  %v1018 = vpop.f32.mrb[0].mxu0
  %1019 = vmatprep.mubr.f32.mxu0 0.0
  %v1020 = vand.u32 %v77, 4294901760
  %1021 = vmatmul.mubr.f32.gmra.mrb[0].mxu0 %v1020
  %v1022 = vpop.f32.mrb[0].mxu0
  %v1023 = vadd.f32 %v838, %v1022
  %v1024 = vpop.f32.mrb[0].mxu0
  %1025 = vmatprep.mubr.f32.mxu0 0.0
  %v1026 = vand.u32 %v80, 4294901760
  %1027 = vmatmul.mubr.f32.gmra.mrb[0].mxu0 %v1026
  %v1028 = vpop.f32.mrb[0].mxu0
  %v1029 = vadd.f32 %v846, %v1028
  %v1030 = vpop.f32.mrb[0].mxu0
  %1031 = vmatprep.mubr.f32.mxu0 0.0
  %v1032 = vand.u32 %v83, 4294901760
  %1033 = vmatmul.mubr.f32.gmra.mrb[0].mxu0 %v1032
  %v1034 = vpop.f32.mrb[0].mxu0
  %v1035 = vadd.f32 %v854, %v1034
  %v1036 = vpop.f32.mrb[0].mxu0
  %1037 = vmatprep.mubr.f32.mxu0 0.0
  %v1038 = vand.u32 %v86, 4294901760
  %1039 = vmatmul.mubr.f32.gmra.mrb[0].mxu0 %v1038
  %v1040 = vpop.f32.mrb[0].mxu0
  %v1041 = vadd.f32 %v862, %v1040
  %v1042 = vpop.f32.mrb[0].mxu0
  %1043 = vmatprep.mubr.f32.mxu0 0.0
  %v1044 = vand.u32 %v89, 4294901760
  %1045 = vmatmul.mubr.f32.gmra.mrb[0].mxu0 %v1044
  %v1046 = vpop.f32.mrb[0].mxu0
  %v1047 = vadd.f32 %v870, %v1046
  %v1048 = vpop.f32.mrb[0].mxu0
  %1049 = vmatprep.mubr.f32.mxu0 0.0
  %v1050 = vand.u32 %v92, 4294901760
  %1051 = vmatmul.mubr.f32.gmra.mrb[0].mxu0 %v1050
  %v1052 = vpop.f32.mrb[0].mxu0
  %v1053 = vadd.f32 %v878, %v1052
  %v1054 = vpop.f32.mrb[0].mxu0
  %1055 = vmatprep.mubr.f32.mxu0 0.0
  %v1056 = vand.u32 %v95, 4294901760
  %1057 = vmatmul.mubr.f32.gmra.mrb[0].mxu0 %v1056
  %v1058 = vpop.f32.mrb[0].mxu0
  %v1059 = vadd.f32 %v886, %v1058
  %v1060 = vpop.f32.mrb[0].mxu0
  %1061 = vdwg.mxu0
  %1062 = vmatprep.subr.mxu0 0.0
  %v1063 = vand.u32 %v37, 4294901760
  %1064 = vmatpush1.msra.mxu0 %v1063
  %1065 = vmatprep.subr.mxu0 0.0
  %v1066 = vand.u32 %v38, 4294901760
  %1067 = vmatpush1.msra.mxu0 %v1066
  %1068 = vmatprep.subr.mxu0 0.0
  %v1069 = vand.u32 %v39, 4294901760
  %1070 = vmatpush1.msra.mxu0 %v1069
  %1071 = vmatprep.subr.mxu0 0.0
  %v1072 = vand.u32 %v40, 4294901760
  %1073 = vmatpush1.msra.mxu0 %v1072
  %1074 = vmatprep.subr.mxu0 0.0
  %1075 = vmatpush1.msra.mxu0 0.0
  %1076 = vmatprep.subr.mxu0 0.0
  %1077 = vmatpush1.msra.mxu0 0.0
  %1078 = vmatprep.subr.mxu0 0.0
  %1079 = vmatpush1.msra.mxu0 0.0
  %1080 = vmatprep.subr.mxu0 0.0
  %1081 = vmatpush1.msra.mxu0 0.0
  %1082 = vmatprep.subr.mxu0 0.0
  %1083 = vmatpush1.msra.mxu0 0.0
  %1084 = vmatprep.subr.mxu0 0.0
  %1085 = vmatpush1.msra.mxu0 0.0
  %1086 = vmatprep.subr.mxu0 0.0
  %1087 = vmatpush1.msra.mxu0 0.0
  %1088 = vmatprep.subr.mxu0 0.0
  %1089 = vmatpush1.msra.mxu0 0.0
  %1090 = vmatprep.subr.mxu0 0.0
  %1091 = vmatpush1.msra.mxu0 0.0
  %1092 = vmatprep.subr.mxu0 0.0
  %1093 = vmatpush1.msra.mxu0 0.0
  %1094 = vmatprep.subr.mxu0 0.0
  %1095 = vmatpush1.msra.mxu0 0.0
  %1096 = vmatprep.subr.mxu0 0.0
  %1097 = vmatpush1.msra.mxu0 0.0
  %1098 = vmatprep.subr.mxu0 0.0
  %1099 = vmatpush1.msra.mxu0 0.0
  %1100 = vmatprep.subr.mxu0 0.0
  %1101 = vmatpush1.msra.mxu0 0.0
  %1102 = vmatprep.subr.mxu0 0.0
  %1103 = vmatpush1.msra.mxu0 0.0
  %1104 = vmatprep.subr.mxu0 0.0
  %1105 = vmatpush1.msra.mxu0 0.0
  %1106 = vmatprep.subr.mxu0 0.0
  %1107 = vmatpush1.msra.mxu0 0.0
  %1108 = vmatprep.subr.mxu0 0.0
  %1109 = vmatpush1.msra.mxu0 0.0
  %1110 = vmatprep.subr.mxu0 0.0
  %1111 = vmatpush1.msra.mxu0 0.0
  %1112 = vmatprep.subr.mxu0 0.0
  %1113 = vmatpush1.msra.mxu0 0.0
  %1114 = vmatprep.subr.mxu0 0.0
  %1115 = vmatpush1.msra.mxu0 0.0
  %1116 = vmatprep.subr.mxu0 0.0
  %1117 = vmatpush1.msra.mxu0 0.0
  %1118 = vmatprep.subr.mxu0 0.0
  %1119 = vmatpush1.msra.mxu0 0.0
  %1120 = vmatprep.subr.mxu0 0.0
  %1121 = vmatpush1.msra.mxu0 0.0
  %1122 = vmatprep.subr.mxu0 0.0
  %1123 = vmatpush1.msra.mxu0 0.0
  %1124 = vmatprep.subr.mxu0 0.0
  %1125 = vmatpush1.msra.mxu0 0.0
  %1126 = vmatprep.subr.mxu0 0.0
  %1127 = vmatpush1.msra.mxu0 0.0
  %1128 = vmatprep.subr.mxu0 0.0
  %1129 = vmatpush1.msra.mxu0 0.0
  %1130 = vmatprep.mubr.f32.mxu0 0.0
  %v1131 = vand.u32 %v50, 4294901760
  %1132 = vmatmul.mubr.f32.gmra.mrb[0].mxu0 %v1131
  %v1133 = vpop.f32.mrb[0].mxu0
  %v1134 = vadd.f32 %v969, %v1133
  %v1135 = vpop.f32.mrb[0].mxu0
  %1136 = vmatprep.mubr.f32.mxu0 0.0
  %v1137 = vand.u32 %v53, 4294901760
  %1138 = vmatmul.mubr.f32.gmra.mrb[0].mxu0 %v1137
  %v1139 = vpop.f32.mrb[0].mxu0
  %v1140 = vadd.f32 %v975, %v1139
  %v1141 = vpop.f32.mrb[0].mxu0
  %1142 = vmatprep.mubr.f32.mxu0 0.0
  %v1143 = vand.u32 %v56, 4294901760
  %1144 = vmatmul.mubr.f32.gmra.mrb[0].mxu0 %v1143
  %v1145 = vpop.f32.mrb[0].mxu0
  %v1146 = vadd.f32 %v981, %v1145
  %v1147 = vpop.f32.mrb[0].mxu0
  %1148 = vmatprep.mubr.f32.mxu0 0.0
  %v1149 = vand.u32 %v59, 4294901760
  %1150 = vmatmul.mubr.f32.gmra.mrb[0].mxu0 %v1149
  %v1151 = vpop.f32.mrb[0].mxu0
  %v1152 = vadd.f32 %v987, %v1151
  %v1153 = vpop.f32.mrb[0].mxu0
  %1154 = vmatprep.mubr.f32.mxu0 0.0
  %v1155 = vand.u32 %v62, 4294901760
  %1156 = vmatmul.mubr.f32.gmra.mrb[0].mxu0 %v1155
  %v1157 = vpop.f32.mrb[0].mxu0
  %v1158 = vadd.f32 %v993, %v1157
  %v1159 = vpop.f32.mrb[0].mxu0
  %1160 = vmatprep.mubr.f32.mxu0 0.0
  %v1161 = vand.u32 %v65, 4294901760
  %1162 = vmatmul.mubr.f32.gmra.mrb[0].mxu0 %v1161
  %v1163 = vpop.f32.mrb[0].mxu0
  %v1164 = vadd.f32 %v999, %v1163
  %v1165 = vpop.f32.mrb[0].mxu0
  %1166 = vmatprep.mubr.f32.mxu0 0.0
  %v1167 = vand.u32 %v68, 4294901760
  %1168 = vmatmul.mubr.f32.gmra.mrb[0].mxu0 %v1167
  %v1169 = vpop.f32.mrb[0].mxu0
  %v1170 = vadd.f32 %v1005, %v1169
  %v1171 = vpop.f32.mrb[0].mxu0
  %1172 = vmatprep.mubr.f32.mxu0 0.0
  %v1173 = vand.u32 %v71, 4294901760
  %1174 = vmatmul.mubr.f32.gmra.mrb[0].mxu0 %v1173
  %v1175 = vpop.f32.mrb[0].mxu0
  %v1176 = vadd.f32 %v1011, %v1175
  %v1177 = vpop.f32.mrb[0].mxu0
  %1178 = vmatprep.mubr.f32.mxu0 0.0
  %v1179 = vand.u32 %v74, 4294901760
  %1180 = vmatmul.mubr.f32.gmra.mrb[0].mxu0 %v1179
  %v1181 = vpop.f32.mrb[0].mxu0
  %v1182 = vadd.f32 %v1017, %v1181
  %v1183 = vpop.f32.mrb[0].mxu0
  %1184 = vmatprep.mubr.f32.mxu0 0.0
  %v1185 = vand.u32 %v77, 4294901760
  %1186 = vmatmul.mubr.f32.gmra.mrb[0].mxu0 %v1185
  %v1187 = vpop.f32.mrb[0].mxu0
  %v1188 = vadd.f32 %v1023, %v1187
  %v1189 = vpop.f32.mrb[0].mxu0
  %1190 = vmatprep.mubr.f32.mxu0 0.0
  %v1191 = vand.u32 %v80, 4294901760
  %1192 = vmatmul.mubr.f32.gmra.mrb[0].mxu0 %v1191
  %v1193 = vpop.f32.mrb[0].mxu0
  %v1194 = vadd.f32 %v1029, %v1193
  %v1195 = vpop.f32.mrb[0].mxu0
  %1196 = vmatprep.mubr.f32.mxu0 0.0
  %v1197 = vand.u32 %v83, 4294901760
  %1198 = vmatmul.mubr.f32.gmra.mrb[0].mxu0 %v1197
  %v1199 = vpop.f32.mrb[0].mxu0
  %v1200 = vadd.f32 %v1035, %v1199
  %v1201 = vpop.f32.mrb[0].mxu0
  %1202 = vmatprep.mubr.f32.mxu0 0.0
  %v1203 = vand.u32 %v86, 4294901760
  %1204 = vmatmul.mubr.f32.gmra.mrb[0].mxu0 %v1203
  %v1205 = vpop.f32.mrb[0].mxu0
  %v1206 = vadd.f32 %v1041, %v1205
  %v1207 = vpop.f32.mrb[0].mxu0
  %1208 = vmatprep.mubr.f32.mxu0 0.0
  %v1209 = vand.u32 %v89, 4294901760
  %1210 = vmatmul.mubr.f32.gmra.mrb[0].mxu0 %v1209
  %v1211 = vpop.f32.mrb[0].mxu0
  %v1212 = vadd.f32 %v1047, %v1211
  %v1213 = vpop.f32.mrb[0].mxu0
  %1214 = vmatprep.mubr.f32.mxu0 0.0
  %v1215 = vand.u32 %v92, 4294901760
  %1216 = vmatmul.mubr.f32.gmra.mrb[0].mxu0 %v1215
  %v1217 = vpop.f32.mrb[0].mxu0
  %v1218 = vadd.f32 %v1053, %v1217
  %v1219 = vpop.f32.mrb[0].mxu0
  %1220 = vmatprep.mubr.f32.mxu0 0.0
  %v1221 = vand.u32 %v95, 4294901760
  %1222 = vmatmul.mubr.f32.gmra.mrb[0].mxu0 %v1221
  %v1223 = vpop.f32.mrb[0].mxu0
  %v1224 = vadd.f32 %v1059, %v1223
  %v1225 = vpop.f32.mrb[0].mxu0
  %1226 = vdwg.mxu0
  %v1227 = vmax.f32 %v1134, 0.0
  %v1228 = vmax.f32 %v1140, 0.0
  %v1229 = vmax.f32 %v1146, 0.0
  %v1230 = vmax.f32 %v1152, 0.0
  %v1231 = vmax.f32 %v1158, 0.0
  %v1232 = vmax.f32 %v1164, 0.0
  %v1233 = vmax.f32 %v1170, 0.0
  %v1234 = vmax.f32 %v1176, 0.0
  %v1235 = vmax.f32 %v1182, 0.0
  %v1236 = vmax.f32 %v1188, 0.0
  %v1237 = vmax.f32 %v1194, 0.0
  %v1238 = vmax.f32 %v1200, 0.0
  %v1239 = vmax.f32 %v1206, 0.0
  %v1240 = vmax.f32 %v1212, 0.0
  %v1241 = vmax.f32 %v1218, 0.0
  %v1242 = vmax.f32 %v1224, 0.0
  %v1243 = vld [vmem:[%s3] sm:$0x1]
  %s1244 = sld [smem:[#allocation2]]
  %v1245 = vstv %s1244
  %vm1246 = vcmask 408576
  %v1248 = vsel %vm1246, %v1243, 0
  %v1251 = vsel %vm1246, %v1227, 0
  %v1254 = vsel %vm1246, %v1228, 0
  %v1257 = vsel %vm1246, %v1229, 0
  %v1260 = vsel %vm1246, %v1230, 0
  %v1263 = vsel %vm1246, %v1231, 0
  %v1266 = vsel %vm1246, %v1232, 0
  %v1269 = vsel %vm1246, %v1233, 0
  %v1272 = vsel %vm1246, %v1234, 0
  %v1275 = vsel %vm1246, %v1235, 0
  %v1278 = vsel %vm1246, %v1236, 0
  %v1281 = vsel %vm1246, %v1237, 0
  %v1284 = vsel %vm1246, %v1238, 0
  %v1287 = vsel %vm1246, %v1239, 0
  %v1290 = vsel %vm1246, %v1240, 0
  %v1293 = vsel %vm1246, %v1241, 0
  %v1296 = vsel %vm1246, %v1242, 0
  %1298 = vmatprep.subr.mxu0 0.0
  %v1299 = vand.u32 %v1251, 4294901760
  %1300 = vmatpush1.xpose.msra.mxu0 %v1299
  %1301 = vmatprep.subr.mxu0 0.0
  %v1302 = vand.u32 %v1254, 4294901760
  %1303 = vmatpush1.xpose.msra.mxu0 %v1302
  %1304 = vmatprep.subr.mxu0 0.0
  %v1305 = vand.u32 %v1257, 4294901760
  %1306 = vmatpush1.xpose.msra.mxu0 %v1305
  %1307 = vmatprep.subr.mxu0 0.0
  %v1308 = vand.u32 %v1260, 4294901760
  %1309 = vmatpush1.xpose.msra.mxu0 %v1308
  %1310 = vmatprep.subr.mxu0 0.0
  %v1311 = vand.u32 %v1263, 4294901760
  %1312 = vmatpush1.xpose.msra.mxu0 %v1311
  %1313 = vmatprep.subr.mxu0 0.0
  %v1314 = vand.u32 %v1266, 4294901760
  %1315 = vmatpush1.xpose.msra.mxu0 %v1314
  %1316 = vmatprep.subr.mxu0 0.0
  %v1317 = vand.u32 %v1269, 4294901760
  %1318 = vmatpush1.xpose.msra.mxu0 %v1317
  %1319 = vmatprep.subr.mxu0 0.0
  %v1320 = vand.u32 %v1272, 4294901760
  %1321 = vmatpush1.xpose.msra.mxu0 %v1320
  %1322 = vmatprep.subr.mxu0 0.0
  %v1323 = vand.u32 %v1275, 4294901760
  %1324 = vmatpush1.xpose.msra.mxu0 %v1323
  %1325 = vmatprep.subr.mxu0 0.0
  %v1326 = vand.u32 %v1278, 4294901760
  %1327 = vmatpush1.xpose.msra.mxu0 %v1326
  %1328 = vmatprep.subr.mxu0 0.0
  %v1329 = vand.u32 %v1281, 4294901760
  %1330 = vmatpush1.xpose.msra.mxu0 %v1329
  %1331 = vmatprep.subr.mxu0 0.0
  %v1332 = vand.u32 %v1284, 4294901760
  %1333 = vmatpush1.xpose.msra.mxu0 %v1332
  %1334 = vmatprep.subr.mxu0 0.0
  %v1335 = vand.u32 %v1287, 4294901760
  %1336 = vmatpush1.xpose.msra.mxu0 %v1335
  %1337 = vmatprep.subr.mxu0 0.0
  %v1338 = vand.u32 %v1290, 4294901760
  %1339 = vmatpush1.xpose.msra.mxu0 %v1338
  %1340 = vmatprep.subr.mxu0 0.0
  %v1341 = vand.u32 %v1293, 4294901760
  %1342 = vmatpush1.xpose.msra.mxu0 %v1341
  %1343 = vmatprep.subr.mxu0 0.0
  %v1344 = vand.u32 %v1296, 4294901760
  %1345 = vmatpush1.xpose.msra.mxu0 %v1344
  %1346 = vmatprep.subr.mxu0 0.0
  %1347 = vmatpush1.xpose.msra.mxu0 0.0
  %1348 = vmatprep.subr.mxu0 0.0
  %1349 = vmatpush1.xpose.msra.mxu0 0.0
  %1350 = vmatprep.subr.mxu0 0.0
  %1351 = vmatpush1.xpose.msra.mxu0 0.0
  %1352 = vmatprep.subr.mxu0 0.0
  %1353 = vmatpush1.xpose.msra.mxu0 0.0
  %1354 = vmatprep.subr.mxu0 0.0
  %1355 = vmatpush1.xpose.msra.mxu0 0.0
  %1356 = vmatprep.subr.mxu0 0.0
  %1357 = vmatpush1.xpose.msra.mxu0 0.0
  %1358 = vmatprep.subr.mxu0 0.0
  %1359 = vmatpush1.xpose.msra.mxu0 0.0
  %1360 = vmatprep.subr.mxu0 0.0
  %1361 = vmatpush1.xpose.msra.mxu0 0.0
  %1362 = vmatprep.subr.mxu0 0.0
  %1363 = vmatpush1.xpose.msra.mxu0 0.0
  %1364 = vmatprep.subr.mxu0 0.0
  %1365 = vmatpush1.xpose.msra.mxu0 0.0
  %1366 = vmatprep.subr.mxu0 0.0
  %1367 = vmatpush1.xpose.msra.mxu0 0.0
  %1368 = vmatprep.subr.mxu0 0.0
  %1369 = vmatpush1.xpose.msra.mxu0 0.0
  %1370 = vmatprep.subr.mxu0 0.0
  %1371 = vmatpush1.xpose.msra.mxu0 0.0
  %1372 = vmatprep.subr.mxu0 0.0
  %1373 = vmatpush1.xpose.msra.mxu0 0.0
  %1374 = vmatprep.subr.mxu0 0.0
  %1375 = vmatpush1.xpose.msra.mxu0 0.0
  %1376 = vmatprep.subr.mxu0 0.0
  %1377 = vmatpush1.xpose.msra.mxu0 0.0
  %1378 = vmatprep.mubr.f32.mxu0 0.0
  %v1379 = vand.u32 %v1248, 4294901760
  %v1380 = vsub.f32 %v1248, %v1379
  %v1381 = vand.u32 %v1380, 4294901760
  %v1382 = vsub.f32 %v1380, %v1381
  %v1383 = vand.u32 %v1382, 4294901760
  %1384 = vmatmul.mubr.f32.gmra.mrb[0].mxu0 %v1383
  %v1385 = vpop.f32.mrb[0].mxu0
  %v1386 = vadd.f32 %v1245, %v1385
  %v1387 = vpop.f32.mrb[0].mxu0
  %1388 = vdwg.mxu0
  %1389 = vmatprep.subr.mxu0 0.0
  %v1390 = vand.u32 %v1251, 4294901760
  %v1391 = vsub.f32 %v1251, %v1390
  %v1392 = vand.u32 %v1391, 4294901760
  %v1393 = vsub.f32 %v1391, %v1392
  %v1394 = vand.u32 %v1393, 4294901760
  %1395 = vmatpush1.xpose.msra.mxu0 %v1394
  %1396 = vmatprep.subr.mxu0 0.0
  %v1397 = vand.u32 %v1254, 4294901760
  %v1398 = vsub.f32 %v1254, %v1397
  %v1399 = vand.u32 %v1398, 4294901760
  %v1400 = vsub.f32 %v1398, %v1399
  %v1401 = vand.u32 %v1400, 4294901760
  %1402 = vmatpush1.xpose.msra.mxu0 %v1401
  %1403 = vmatprep.subr.mxu0 0.0
  %v1404 = vand.u32 %v1257, 4294901760
  %v1405 = vsub.f32 %v1257, %v1404
  %v1406 = vand.u32 %v1405, 4294901760
  %v1407 = vsub.f32 %v1405, %v1406
  %v1408 = vand.u32 %v1407, 4294901760
  %1409 = vmatpush1.xpose.msra.mxu0 %v1408
  %1410 = vmatprep.subr.mxu0 0.0
  %v1411 = vand.u32 %v1260, 4294901760
  %v1412 = vsub.f32 %v1260, %v1411
  %v1413 = vand.u32 %v1412, 4294901760
  %v1414 = vsub.f32 %v1412, %v1413
  %v1415 = vand.u32 %v1414, 4294901760
  %1416 = vmatpush1.xpose.msra.mxu0 %v1415
  %1417 = vmatprep.subr.mxu0 0.0
  %v1418 = vand.u32 %v1263, 4294901760
  %v1419 = vsub.f32 %v1263, %v1418
  %v1420 = vand.u32 %v1419, 4294901760
  %v1421 = vsub.f32 %v1419, %v1420
  %v1422 = vand.u32 %v1421, 4294901760
  %1423 = vmatpush1.xpose.msra.mxu0 %v1422
  %1424 = vmatprep.subr.mxu0 0.0
  %v1425 = vand.u32 %v1266, 4294901760
  %v1426 = vsub.f32 %v1266, %v1425
  %v1427 = vand.u32 %v1426, 4294901760
  %v1428 = vsub.f32 %v1426, %v1427
  %v1429 = vand.u32 %v1428, 4294901760
  %1430 = vmatpush1.xpose.msra.mxu0 %v1429
  %1431 = vmatprep.subr.mxu0 0.0
  %v1432 = vand.u32 %v1269, 4294901760
  %v1433 = vsub.f32 %v1269, %v1432
  %v1434 = vand.u32 %v1433, 4294901760
  %v1435 = vsub.f32 %v1433, %v1434
  %v1436 = vand.u32 %v1435, 4294901760
  %1437 = vmatpush1.xpose.msra.mxu0 %v1436
  %1438 = vmatprep.subr.mxu0 0.0
  %v1439 = vand.u32 %v1272, 4294901760
  %v1440 = vsub.f32 %v1272, %v1439
  %v1441 = vand.u32 %v1440, 4294901760
  %v1442 = vsub.f32 %v1440, %v1441
  %v1443 = vand.u32 %v1442, 4294901760
  %1444 = vmatpush1.xpose.msra.mxu0 %v1443
  %1445 = vmatprep.subr.mxu0 0.0
  %v1446 = vand.u32 %v1275, 4294901760
  %v1447 = vsub.f32 %v1275, %v1446
  %v1448 = vand.u32 %v1447, 4294901760
  %v1449 = vsub.f32 %v1447, %v1448
  %v1450 = vand.u32 %v1449, 4294901760
  %1451 = vmatpush1.xpose.msra.mxu0 %v1450
  %1452 = vmatprep.subr.mxu0 0.0
  %v1453 = vand.u32 %v1278, 4294901760
  %v1454 = vsub.f32 %v1278, %v1453
  %v1455 = vand.u32 %v1454, 4294901760
  %v1456 = vsub.f32 %v1454, %v1455
  %v1457 = vand.u32 %v1456, 4294901760
  %1458 = vmatpush1.xpose.msra.mxu0 %v1457
  %1459 = vmatprep.subr.mxu0 0.0
  %v1460 = vand.u32 %v1281, 4294901760
  %v1461 = vsub.f32 %v1281, %v1460
  %v1462 = vand.u32 %v1461, 4294901760
  %v1463 = vsub.f32 %v1461, %v1462
  %v1464 = vand.u32 %v1463, 4294901760
  %1465 = vmatpush1.xpose.msra.mxu0 %v1464
  %1466 = vmatprep.subr.mxu0 0.0
  %v1467 = vand.u32 %v1284, 4294901760
  %v1468 = vsub.f32 %v1284, %v1467
  %v1469 = vand.u32 %v1468, 4294901760
  %v1470 = vsub.f32 %v1468, %v1469
  %v1471 = vand.u32 %v1470, 4294901760
  %1472 = vmatpush1.xpose.msra.mxu0 %v1471
  %1473 = vmatprep.subr.mxu0 0.0
  %v1474 = vand.u32 %v1287, 4294901760
  %v1475 = vsub.f32 %v1287, %v1474
  %v1476 = vand.u32 %v1475, 4294901760
  %v1477 = vsub.f32 %v1475, %v1476
  %v1478 = vand.u32 %v1477, 4294901760
  %1479 = vmatpush1.xpose.msra.mxu0 %v1478
  %1480 = vmatprep.subr.mxu0 0.0
  %v1481 = vand.u32 %v1290, 4294901760
  %v1482 = vsub.f32 %v1290, %v1481
  %v1483 = vand.u32 %v1482, 4294901760
  %v1484 = vsub.f32 %v1482, %v1483
  %v1485 = vand.u32 %v1484, 4294901760
  %1486 = vmatpush1.xpose.msra.mxu0 %v1485
  %1487 = vmatprep.subr.mxu0 0.0
  %v1488 = vand.u32 %v1293, 4294901760
  %v1489 = vsub.f32 %v1293, %v1488
  %v1490 = vand.u32 %v1489, 4294901760
  %v1491 = vsub.f32 %v1489, %v1490
  %v1492 = vand.u32 %v1491, 4294901760
  %1493 = vmatpush1.xpose.msra.mxu0 %v1492
  %1494 = vmatprep.subr.mxu0 0.0
  %v1495 = vand.u32 %v1296, 4294901760
  %v1496 = vsub.f32 %v1296, %v1495
  %v1497 = vand.u32 %v1496, 4294901760
  %v1498 = vsub.f32 %v1496, %v1497
  %v1499 = vand.u32 %v1498, 4294901760
  %1500 = vmatpush1.xpose.msra.mxu0 %v1499
  %1501 = vmatprep.subr.mxu0 0.0
  %1502 = vmatpush1.xpose.msra.mxu0 0.0
  %1503 = vmatprep.subr.mxu0 0.0
  %1504 = vmatpush1.xpose.msra.mxu0 0.0
  %1505 = vmatprep.subr.mxu0 0.0
  %1506 = vmatpush1.xpose.msra.mxu0 0.0
  %1507 = vmatprep.subr.mxu0 0.0
  %1508 = vmatpush1.xpose.msra.mxu0 0.0
  %1509 = vmatprep.subr.mxu0 0.0
  %1510 = vmatpush1.xpose.msra.mxu0 0.0
  %1511 = vmatprep.subr.mxu0 0.0
  %1512 = vmatpush1.xpose.msra.mxu0 0.0
  %1513 = vmatprep.subr.mxu0 0.0
  %1514 = vmatpush1.xpose.msra.mxu0 0.0
  %1515 = vmatprep.subr.mxu0 0.0
  %1516 = vmatpush1.xpose.msra.mxu0 0.0
  %1517 = vmatprep.subr.mxu0 0.0
  %1518 = vmatpush1.xpose.msra.mxu0 0.0
  %1519 = vmatprep.subr.mxu0 0.0
  %1520 = vmatpush1.xpose.msra.mxu0 0.0
  %1521 = vmatprep.subr.mxu0 0.0
  %1522 = vmatpush1.xpose.msra.mxu0 0.0
  %1523 = vmatprep.subr.mxu0 0.0
  %1524 = vmatpush1.xpose.msra.mxu0 0.0
  %1525 = vmatprep.subr.mxu0 0.0
  %1526 = vmatpush1.xpose.msra.mxu0 0.0
  %1527 = vmatprep.subr.mxu0 0.0
  %1528 = vmatpush1.xpose.msra.mxu0 0.0
  %1529 = vmatprep.subr.mxu0 0.0
  %1530 = vmatpush1.xpose.msra.mxu0 0.0
  %1531 = vmatprep.subr.mxu0 0.0
  %1532 = vmatpush1.xpose.msra.mxu0 0.0
  %1533 = vmatprep.mubr.f32.mxu0 0.0
  %v1534 = vand.u32 %v1248, 4294901760
  %1535 = vmatmul.mubr.f32.gmra.mrb[0].mxu0 %v1534
  %v1536 = vpop.f32.mrb[0].mxu0
  %v1537 = vadd.f32 %v1386, %v1536
  %v1538 = vpop.f32.mrb[0].mxu0
  %1539 = vdwg.mxu0
  %1540 = vmatprep.subr.mxu0 0.0
  %v1541 = vand.u32 %v1251, 4294901760
  %v1542 = vsub.f32 %v1251, %v1541
  %1543 = vmatpush1.xpose.msra.mxu0 %v1542
  %1544 = vmatprep.subr.mxu0 0.0
  %v1545 = vand.u32 %v1254, 4294901760
  %v1546 = vsub.f32 %v1254, %v1545
  %1547 = vmatpush1.xpose.msra.mxu0 %v1546
  %1548 = vmatprep.subr.mxu0 0.0
  %v1549 = vand.u32 %v1257, 4294901760
  %v1550 = vsub.f32 %v1257, %v1549
  %1551 = vmatpush1.xpose.msra.mxu0 %v1550
  %1552 = vmatprep.subr.mxu0 0.0
  %v1553 = vand.u32 %v1260, 4294901760
  %v1554 = vsub.f32 %v1260, %v1553
  %1555 = vmatpush1.xpose.msra.mxu0 %v1554
  %1556 = vmatprep.subr.mxu0 0.0
  %v1557 = vand.u32 %v1263, 4294901760
  %v1558 = vsub.f32 %v1263, %v1557
  %1559 = vmatpush1.xpose.msra.mxu0 %v1558
  %1560 = vmatprep.subr.mxu0 0.0
  %v1561 = vand.u32 %v1266, 4294901760
  %v1562 = vsub.f32 %v1266, %v1561
  %1563 = vmatpush1.xpose.msra.mxu0 %v1562
  %1564 = vmatprep.subr.mxu0 0.0
  %v1565 = vand.u32 %v1269, 4294901760
  %v1566 = vsub.f32 %v1269, %v1565
  %1567 = vmatpush1.xpose.msra.mxu0 %v1566
  %1568 = vmatprep.subr.mxu0 0.0
  %v1569 = vand.u32 %v1272, 4294901760
  %v1570 = vsub.f32 %v1272, %v1569
  %1571 = vmatpush1.xpose.msra.mxu0 %v1570
  %1572 = vmatprep.subr.mxu0 0.0
  %v1573 = vand.u32 %v1275, 4294901760
  %v1574 = vsub.f32 %v1275, %v1573
  %1575 = vmatpush1.xpose.msra.mxu0 %v1574
  %1576 = vmatprep.subr.mxu0 0.0
  %v1577 = vand.u32 %v1278, 4294901760
  %v1578 = vsub.f32 %v1278, %v1577
  %1579 = vmatpush1.xpose.msra.mxu0 %v1578
  %1580 = vmatprep.subr.mxu0 0.0
  %v1581 = vand.u32 %v1281, 4294901760
  %v1582 = vsub.f32 %v1281, %v1581
  %1583 = vmatpush1.xpose.msra.mxu0 %v1582
  %1584 = vmatprep.subr.mxu0 0.0
  %v1585 = vand.u32 %v1284, 4294901760
  %v1586 = vsub.f32 %v1284, %v1585
  %1587 = vmatpush1.xpose.msra.mxu0 %v1586
  %1588 = vmatprep.subr.mxu0 0.0
  %v1589 = vand.u32 %v1287, 4294901760
  %v1590 = vsub.f32 %v1287, %v1589
  %1591 = vmatpush1.xpose.msra.mxu0 %v1590
  %1592 = vmatprep.subr.mxu0 0.0
  %v1593 = vand.u32 %v1290, 4294901760
  %v1594 = vsub.f32 %v1290, %v1593
  %1595 = vmatpush1.xpose.msra.mxu0 %v1594
  %1596 = vmatprep.subr.mxu0 0.0
  %v1597 = vand.u32 %v1293, 4294901760
  %v1598 = vsub.f32 %v1293, %v1597
  %1599 = vmatpush1.xpose.msra.mxu0 %v1598
  %1600 = vmatprep.subr.mxu0 0.0
  %v1601 = vand.u32 %v1296, 4294901760
  %v1602 = vsub.f32 %v1296, %v1601
  %1603 = vmatpush1.xpose.msra.mxu0 %v1602
  %1604 = vmatprep.subr.mxu0 0.0
  %1605 = vmatpush1.xpose.msra.mxu0 0.0
  %1606 = vmatprep.subr.mxu0 0.0
  %1607 = vmatpush1.xpose.msra.mxu0 0.0
  %1608 = vmatprep.subr.mxu0 0.0
  %1609 = vmatpush1.xpose.msra.mxu0 0.0
  %1610 = vmatprep.subr.mxu0 0.0
  %1611 = vmatpush1.xpose.msra.mxu0 0.0
  %1612 = vmatprep.subr.mxu0 0.0
  %1613 = vmatpush1.xpose.msra.mxu0 0.0
  %1614 = vmatprep.subr.mxu0 0.0
  %1615 = vmatpush1.xpose.msra.mxu0 0.0
  %1616 = vmatprep.subr.mxu0 0.0
  %1617 = vmatpush1.xpose.msra.mxu0 0.0
  %1618 = vmatprep.subr.mxu0 0.0
  %1619 = vmatpush1.xpose.msra.mxu0 0.0
  %1620 = vmatprep.subr.mxu0 0.0
  %1621 = vmatpush1.xpose.msra.mxu0 0.0
  %1622 = vmatprep.subr.mxu0 0.0
  %1623 = vmatpush1.xpose.msra.mxu0 0.0
  %1624 = vmatprep.subr.mxu0 0.0
  %1625 = vmatpush1.xpose.msra.mxu0 0.0
  %1626 = vmatprep.subr.mxu0 0.0
  %1627 = vmatpush1.xpose.msra.mxu0 0.0
  %1628 = vmatprep.subr.mxu0 0.0
  %1629 = vmatpush1.xpose.msra.mxu0 0.0
  %1630 = vmatprep.subr.mxu0 0.0
  %1631 = vmatpush1.xpose.msra.mxu0 0.0
  %1632 = vmatprep.subr.mxu0 0.0
  %1633 = vmatpush1.xpose.msra.mxu0 0.0
  %1634 = vmatprep.subr.mxu0 0.0
  %1635 = vmatpush1.xpose.msra.mxu0 0.0
  %1636 = vmatprep.mubr.f32.mxu0 0.0
  %v1637 = vand.u32 %v1248, 4294901760
  %v1638 = vsub.f32 %v1248, %v1637
  %1639 = vmatmul.mubr.f32.gmra.mrb[0].mxu0 %v1638
  %v1640 = vpop.f32.mrb[0].mxu0
  %v1641 = vadd.f32 %v1537, %v1640
  %v1642 = vpop.f32.mrb[0].mxu0
  %1643 = vdwg.mxu0
  %1644 = vmatprep.subr.mxu0 0.0
  %v1645 = vand.u32 %v1251, 4294901760
  %1646 = vmatpush1.xpose.msra.mxu0 %v1645
  %1647 = vmatprep.subr.mxu0 0.0
  %v1648 = vand.u32 %v1254, 4294901760
  %1649 = vmatpush1.xpose.msra.mxu0 %v1648
  %1650 = vmatprep.subr.mxu0 0.0
  %v1651 = vand.u32 %v1257, 4294901760
  %1652 = vmatpush1.xpose.msra.mxu0 %v1651
  %1653 = vmatprep.subr.mxu0 0.0
  %v1654 = vand.u32 %v1260, 4294901760
  %1655 = vmatpush1.xpose.msra.mxu0 %v1654
  %1656 = vmatprep.subr.mxu0 0.0
  %v1657 = vand.u32 %v1263, 4294901760
  %1658 = vmatpush1.xpose.msra.mxu0 %v1657
  %1659 = vmatprep.subr.mxu0 0.0
  %v1660 = vand.u32 %v1266, 4294901760
  %1661 = vmatpush1.xpose.msra.mxu0 %v1660
  %1662 = vmatprep.subr.mxu0 0.0
  %v1663 = vand.u32 %v1269, 4294901760
  %1664 = vmatpush1.xpose.msra.mxu0 %v1663
  %1665 = vmatprep.subr.mxu0 0.0
  %v1666 = vand.u32 %v1272, 4294901760
  %1667 = vmatpush1.xpose.msra.mxu0 %v1666
  %1668 = vmatprep.subr.mxu0 0.0
  %v1669 = vand.u32 %v1275, 4294901760
  %1670 = vmatpush1.xpose.msra.mxu0 %v1669
  %1671 = vmatprep.subr.mxu0 0.0
  %v1672 = vand.u32 %v1278, 4294901760
  %1673 = vmatpush1.xpose.msra.mxu0 %v1672
  %1674 = vmatprep.subr.mxu0 0.0
  %v1675 = vand.u32 %v1281, 4294901760
  %1676 = vmatpush1.xpose.msra.mxu0 %v1675
  %1677 = vmatprep.subr.mxu0 0.0
  %v1678 = vand.u32 %v1284, 4294901760
  %1679 = vmatpush1.xpose.msra.mxu0 %v1678
  %1680 = vmatprep.subr.mxu0 0.0
  %v1681 = vand.u32 %v1287, 4294901760
  %1682 = vmatpush1.xpose.msra.mxu0 %v1681
  %1683 = vmatprep.subr.mxu0 0.0
  %v1684 = vand.u32 %v1290, 4294901760
  %1685 = vmatpush1.xpose.msra.mxu0 %v1684
  %1686 = vmatprep.subr.mxu0 0.0
  %v1687 = vand.u32 %v1293, 4294901760
  %1688 = vmatpush1.xpose.msra.mxu0 %v1687
  %1689 = vmatprep.subr.mxu0 0.0
  %v1690 = vand.u32 %v1296, 4294901760
  %1691 = vmatpush1.xpose.msra.mxu0 %v1690
  %1692 = vmatprep.subr.mxu0 0.0
  %1693 = vmatpush1.xpose.msra.mxu0 0.0
  %1694 = vmatprep.subr.mxu0 0.0
  %1695 = vmatpush1.xpose.msra.mxu0 0.0
  %1696 = vmatprep.subr.mxu0 0.0
  %1697 = vmatpush1.xpose.msra.mxu0 0.0
  %1698 = vmatprep.subr.mxu0 0.0
  %1699 = vmatpush1.xpose.msra.mxu0 0.0
  %1700 = vmatprep.subr.mxu0 0.0
  %1701 = vmatpush1.xpose.msra.mxu0 0.0
  %1702 = vmatprep.subr.mxu0 0.0
  %1703 = vmatpush1.xpose.msra.mxu0 0.0
  %1704 = vmatprep.subr.mxu0 0.0
  %1705 = vmatpush1.xpose.msra.mxu0 0.0
  %1706 = vmatprep.subr.mxu0 0.0
  %1707 = vmatpush1.xpose.msra.mxu0 0.0
  %1708 = vmatprep.subr.mxu0 0.0
  %1709 = vmatpush1.xpose.msra.mxu0 0.0
  %1710 = vmatprep.subr.mxu0 0.0
  %1711 = vmatpush1.xpose.msra.mxu0 0.0
  %1712 = vmatprep.subr.mxu0 0.0
  %1713 = vmatpush1.xpose.msra.mxu0 0.0
  %1714 = vmatprep.subr.mxu0 0.0
  %1715 = vmatpush1.xpose.msra.mxu0 0.0
  %1716 = vmatprep.subr.mxu0 0.0
  %1717 = vmatpush1.xpose.msra.mxu0 0.0
  %1718 = vmatprep.subr.mxu0 0.0
  %1719 = vmatpush1.xpose.msra.mxu0 0.0
  %1720 = vmatprep.subr.mxu0 0.0
  %1721 = vmatpush1.xpose.msra.mxu0 0.0
  %1722 = vmatprep.subr.mxu0 0.0
  %1723 = vmatpush1.xpose.msra.mxu0 0.0
  %1724 = vmatprep.mubr.f32.mxu0 0.0
  %v1725 = vand.u32 %v1248, 4294901760
  %v1726 = vsub.f32 %v1248, %v1725
  %v1727 = vand.u32 %v1726, 4294901760
  %1728 = vmatmul.mubr.f32.gmra.mrb[0].mxu0 %v1727
  %v1729 = vpop.f32.mrb[0].mxu0
  %v1730 = vadd.f32 %v1641, %v1729
  %v1731 = vpop.f32.mrb[0].mxu0
  %1732 = vdwg.mxu0
  %1733 = vmatprep.subr.mxu0 0.0
  %v1734 = vand.u32 %v1251, 4294901760
  %v1735 = vsub.f32 %v1251, %v1734
  %v1736 = vand.u32 %v1735, 4294901760
  %1737 = vmatpush1.xpose.msra.mxu0 %v1736
  %1738 = vmatprep.subr.mxu0 0.0
  %v1739 = vand.u32 %v1254, 4294901760
  %v1740 = vsub.f32 %v1254, %v1739
  %v1741 = vand.u32 %v1740, 4294901760
  %1742 = vmatpush1.xpose.msra.mxu0 %v1741
  %1743 = vmatprep.subr.mxu0 0.0
  %v1744 = vand.u32 %v1257, 4294901760
  %v1745 = vsub.f32 %v1257, %v1744
  %v1746 = vand.u32 %v1745, 4294901760
  %1747 = vmatpush1.xpose.msra.mxu0 %v1746
  %1748 = vmatprep.subr.mxu0 0.0
  %v1749 = vand.u32 %v1260, 4294901760
  %v1750 = vsub.f32 %v1260, %v1749
  %v1751 = vand.u32 %v1750, 4294901760
  %1752 = vmatpush1.xpose.msra.mxu0 %v1751
  %1753 = vmatprep.subr.mxu0 0.0
  %v1754 = vand.u32 %v1263, 4294901760
  %v1755 = vsub.f32 %v1263, %v1754
  %v1756 = vand.u32 %v1755, 4294901760
  %1757 = vmatpush1.xpose.msra.mxu0 %v1756
  %1758 = vmatprep.subr.mxu0 0.0
  %v1759 = vand.u32 %v1266, 4294901760
  %v1760 = vsub.f32 %v1266, %v1759
  %v1761 = vand.u32 %v1760, 4294901760
  %1762 = vmatpush1.xpose.msra.mxu0 %v1761
  %1763 = vmatprep.subr.mxu0 0.0
  %v1764 = vand.u32 %v1269, 4294901760
  %v1765 = vsub.f32 %v1269, %v1764
  %v1766 = vand.u32 %v1765, 4294901760
  %1767 = vmatpush1.xpose.msra.mxu0 %v1766
  %1768 = vmatprep.subr.mxu0 0.0
  %v1769 = vand.u32 %v1272, 4294901760
  %v1770 = vsub.f32 %v1272, %v1769
  %v1771 = vand.u32 %v1770, 4294901760
  %1772 = vmatpush1.xpose.msra.mxu0 %v1771
  %1773 = vmatprep.subr.mxu0 0.0
  %v1774 = vand.u32 %v1275, 4294901760
  %v1775 = vsub.f32 %v1275, %v1774
  %v1776 = vand.u32 %v1775, 4294901760
  %1777 = vmatpush1.xpose.msra.mxu0 %v1776
  %1778 = vmatprep.subr.mxu0 0.0
  %v1779 = vand.u32 %v1278, 4294901760
  %v1780 = vsub.f32 %v1278, %v1779
  %v1781 = vand.u32 %v1780, 4294901760
  %1782 = vmatpush1.xpose.msra.mxu0 %v1781
  %1783 = vmatprep.subr.mxu0 0.0
  %v1784 = vand.u32 %v1281, 4294901760
  %v1785 = vsub.f32 %v1281, %v1784
  %v1786 = vand.u32 %v1785, 4294901760
  %1787 = vmatpush1.xpose.msra.mxu0 %v1786
  %1788 = vmatprep.subr.mxu0 0.0
  %v1789 = vand.u32 %v1284, 4294901760
  %v1790 = vsub.f32 %v1284, %v1789
  %v1791 = vand.u32 %v1790, 4294901760
  %1792 = vmatpush1.xpose.msra.mxu0 %v1791
  %1793 = vmatprep.subr.mxu0 0.0
  %v1794 = vand.u32 %v1287, 4294901760
  %v1795 = vsub.f32 %v1287, %v1794
  %v1796 = vand.u32 %v1795, 4294901760
  %1797 = vmatpush1.xpose.msra.mxu0 %v1796
  %1798 = vmatprep.subr.mxu0 0.0
  %v1799 = vand.u32 %v1290, 4294901760
  %v1800 = vsub.f32 %v1290, %v1799
  %v1801 = vand.u32 %v1800, 4294901760
  %1802 = vmatpush1.xpose.msra.mxu0 %v1801
  %1803 = vmatprep.subr.mxu0 0.0
  %v1804 = vand.u32 %v1293, 4294901760
  %v1805 = vsub.f32 %v1293, %v1804
  %v1806 = vand.u32 %v1805, 4294901760
  %1807 = vmatpush1.xpose.msra.mxu0 %v1806
  %1808 = vmatprep.subr.mxu0 0.0
  %v1809 = vand.u32 %v1296, 4294901760
  %v1810 = vsub.f32 %v1296, %v1809
  %v1811 = vand.u32 %v1810, 4294901760
  %1812 = vmatpush1.xpose.msra.mxu0 %v1811
  %1813 = vmatprep.subr.mxu0 0.0
  %1814 = vmatpush1.xpose.msra.mxu0 0.0
  %1815 = vmatprep.subr.mxu0 0.0
  %1816 = vmatpush1.xpose.msra.mxu0 0.0
  %1817 = vmatprep.subr.mxu0 0.0
  %1818 = vmatpush1.xpose.msra.mxu0 0.0
  %1819 = vmatprep.subr.mxu0 0.0
  %1820 = vmatpush1.xpose.msra.mxu0 0.0
  %1821 = vmatprep.subr.mxu0 0.0
  %1822 = vmatpush1.xpose.msra.mxu0 0.0
  %1823 = vmatprep.subr.mxu0 0.0
  %1824 = vmatpush1.xpose.msra.mxu0 0.0
  %1825 = vmatprep.subr.mxu0 0.0
  %1826 = vmatpush1.xpose.msra.mxu0 0.0
  %1827 = vmatprep.subr.mxu0 0.0
  %1828 = vmatpush1.xpose.msra.mxu0 0.0
  %1829 = vmatprep.subr.mxu0 0.0
  %1830 = vmatpush1.xpose.msra.mxu0 0.0
  %1831 = vmatprep.subr.mxu0 0.0
  %1832 = vmatpush1.xpose.msra.mxu0 0.0
  %1833 = vmatprep.subr.mxu0 0.0
  %1834 = vmatpush1.xpose.msra.mxu0 0.0
  %1835 = vmatprep.subr.mxu0 0.0
  %1836 = vmatpush1.xpose.msra.mxu0 0.0
  %1837 = vmatprep.subr.mxu0 0.0
  %1838 = vmatpush1.xpose.msra.mxu0 0.0
  %1839 = vmatprep.subr.mxu0 0.0
  %1840 = vmatpush1.xpose.msra.mxu0 0.0
  %1841 = vmatprep.subr.mxu0 0.0
  %1842 = vmatpush1.xpose.msra.mxu0 0.0
  %1843 = vmatprep.subr.mxu0 0.0
  %1844 = vmatpush1.xpose.msra.mxu0 0.0
  %1845 = vmatprep.mubr.f32.mxu0 0.0
  %v1846 = vand.u32 %v1248, 4294901760
  %1847 = vmatmul.mubr.f32.gmra.mrb[0].mxu0 %v1846
  %v1848 = vpop.f32.mrb[0].mxu0
  %v1849 = vadd.f32 %v1730, %v1848
  %v1850 = vpop.f32.mrb[0].mxu0
  %1851 = vdwg.mxu0
  %1852 = vmatprep.subr.mxu0 0.0
  %v1853 = vand.u32 %v1251, 4294901760
  %1854 = vmatpush1.xpose.msra.mxu0 %v1853
  %1855 = vmatprep.subr.mxu0 0.0
  %v1856 = vand.u32 %v1254, 4294901760
  %1857 = vmatpush1.xpose.msra.mxu0 %v1856
  %1858 = vmatprep.subr.mxu0 0.0
  %v1859 = vand.u32 %v1257, 4294901760
  %1860 = vmatpush1.xpose.msra.mxu0 %v1859
  %1861 = vmatprep.subr.mxu0 0.0
  %v1862 = vand.u32 %v1260, 4294901760
  %1863 = vmatpush1.xpose.msra.mxu0 %v1862
  %1864 = vmatprep.subr.mxu0 0.0
  %v1865 = vand.u32 %v1263, 4294901760
  %1866 = vmatpush1.xpose.msra.mxu0 %v1865
  %1867 = vmatprep.subr.mxu0 0.0
  %v1868 = vand.u32 %v1266, 4294901760
  %1869 = vmatpush1.xpose.msra.mxu0 %v1868
  %1870 = vmatprep.subr.mxu0 0.0
  %v1871 = vand.u32 %v1269, 4294901760
  %1872 = vmatpush1.xpose.msra.mxu0 %v1871
  %1873 = vmatprep.subr.mxu0 0.0
  %v1874 = vand.u32 %v1272, 4294901760
  %1875 = vmatpush1.xpose.msra.mxu0 %v1874
  %1876 = vmatprep.subr.mxu0 0.0
  %v1877 = vand.u32 %v1275, 4294901760
  %1878 = vmatpush1.xpose.msra.mxu0 %v1877
  %1879 = vmatprep.subr.mxu0 0.0
  %v1880 = vand.u32 %v1278, 4294901760
  %1881 = vmatpush1.xpose.msra.mxu0 %v1880
  %1882 = vmatprep.subr.mxu0 0.0
  %v1883 = vand.u32 %v1281, 4294901760
  %1884 = vmatpush1.xpose.msra.mxu0 %v1883
  %1885 = vmatprep.subr.mxu0 0.0
  %v1886 = vand.u32 %v1284, 4294901760
  %1887 = vmatpush1.xpose.msra.mxu0 %v1886
  %1888 = vmatprep.subr.mxu0 0.0
  %v1889 = vand.u32 %v1287, 4294901760
  %1890 = vmatpush1.xpose.msra.mxu0 %v1889
  %1891 = vmatprep.subr.mxu0 0.0
  %v1892 = vand.u32 %v1290, 4294901760
  %1893 = vmatpush1.xpose.msra.mxu0 %v1892
  %1894 = vmatprep.subr.mxu0 0.0
  %v1895 = vand.u32 %v1293, 4294901760
  %1896 = vmatpush1.xpose.msra.mxu0 %v1895
  %1897 = vmatprep.subr.mxu0 0.0
  %v1898 = vand.u32 %v1296, 4294901760
  %1899 = vmatpush1.xpose.msra.mxu0 %v1898
  %1900 = vmatprep.subr.mxu0 0.0
  %1901 = vmatpush1.xpose.msra.mxu0 0.0
  %1902 = vmatprep.subr.mxu0 0.0
  %1903 = vmatpush1.xpose.msra.mxu0 0.0
  %1904 = vmatprep.subr.mxu0 0.0
  %1905 = vmatpush1.xpose.msra.mxu0 0.0
  %1906 = vmatprep.subr.mxu0 0.0
  %1907 = vmatpush1.xpose.msra.mxu0 0.0
  %1908 = vmatprep.subr.mxu0 0.0
  %1909 = vmatpush1.xpose.msra.mxu0 0.0
  %1910 = vmatprep.subr.mxu0 0.0
  %1911 = vmatpush1.xpose.msra.mxu0 0.0
  %1912 = vmatprep.subr.mxu0 0.0
  %1913 = vmatpush1.xpose.msra.mxu0 0.0
  %1914 = vmatprep.subr.mxu0 0.0
  %1915 = vmatpush1.xpose.msra.mxu0 0.0
  %1916 = vmatprep.subr.mxu0 0.0
  %1917 = vmatpush1.xpose.msra.mxu0 0.0
  %1918 = vmatprep.subr.mxu0 0.0
  %1919 = vmatpush1.xpose.msra.mxu0 0.0
  %1920 = vmatprep.subr.mxu0 0.0
  %1921 = vmatpush1.xpose.msra.mxu0 0.0
  %1922 = vmatprep.subr.mxu0 0.0
  %1923 = vmatpush1.xpose.msra.mxu0 0.0
  %1924 = vmatprep.subr.mxu0 0.0
  %1925 = vmatpush1.xpose.msra.mxu0 0.0
  %1926 = vmatprep.subr.mxu0 0.0
  %1927 = vmatpush1.xpose.msra.mxu0 0.0
  %1928 = vmatprep.subr.mxu0 0.0
  %1929 = vmatpush1.xpose.msra.mxu0 0.0
  %1930 = vmatprep.subr.mxu0 0.0
  %1931 = vmatpush1.xpose.msra.mxu0 0.0
  %1932 = vmatprep.mubr.f32.mxu0 0.0
  %v1933 = vand.u32 %v1248, 4294901760
  %1934 = vmatmul.mubr.f32.gmra.mrb[0].mxu0 %v1933
  %v1935 = vpop.f32.mrb[0].mxu0
  %v1936 = vadd.f32 %v1849, %v1935
  %v1937 = vpop.f32.mrb[0].mxu0
  %1938 = vdwg.mxu0
  %v1939 = vxor.u32 %v1936, 2147483648
  %v1940 = vmul.f32 %v1939, 1.442695
  %v1941 = vpow.pop %v1940
  %v1942 = vadd.f32 %v1941, 1.0
  %v1943 = vrcp.pop %v1942
  %v1944 = vmul.f32 1.0, %v1943
  %1945 = vst [vmem:[%s5] sm:$0x1] %v1944
  // Predicated region
  $region22: #{medium_model_forward.1} parent=0 // pred_check
    _
  $region23: #{medium_model_forward.1} parent=0 // pred_check_branch
    %1947 = sbr.rel (0) target = $region25
  $region24: #{medium_model_forward.1} parent=0 // pred_region
    _
  $region25: #{medium_model_forward.1} parent=0 // pred_fallthru
    _
  // Predicated region
  $region26: #{medium_model_forward.1} parent=0 // pred_check
    _
  $region27: #{medium_model_forward.1} parent=0 // pred_check_branch
    %1949 = sbr.rel (0) target = $region29
  $region28: #{medium_model_forward.1} parent=0 // pred_region
    _
  $region29: #{medium_model_forward.1} parent=0 // pred_fallthru
    _

</llo_original>
